<compile_context>
chip_gen: v5e
topology: v5e:2x2
jax: 0.10.0
libtpu: 0.0.40
codegen_flags: <defaults>
</compile_context>

<pallas_src>
import numpy as np
import jax
import jax.numpy as jnp
from jax import lax
from jax.experimental import pallas as pl
from jax.experimental.pallas import tpu as pltpu

# Keeps the pure-JAX reference an accurate f32 ground truth; kernel dots explicitly use
# Precision.DEFAULT (single-pass bf16) and are validated at a bf16-appropriate tolerance.
jax.config.update("jax_default_matmul_precision", "highest")

L_IN = 20     # input length implied by LSTM input_size: 160 = 32 * (20 // 2 // 2)
C = 32        # conv channels
H = 32        # LSTM hidden size
OUT = 3       # head output size
EPS = 1e-5    # BatchNorm eps

_PREC = lax.Precision.DEFAULT    # single MXU pass; operands bf16, accumulation f32


# --------------------------------------------------------------------------------------
# Single fused kernel: conv path + flatten (via weight permutation) + biLSTM + head.
# --------------------------------------------------------------------------------------
def fused_kernel(x_ref, vec_ref, mat_ref, out_ref):
    B = out_ref.shape[0]          # batch rows == LSTM time steps (unbatched 2-D LSTM input)
    T = B
    n1 = 4 * 5 * B                # rows before MaxPool1 (one row per original position)
    n2 = 2 * 5 * B                # rows after  MaxPool1
    n3 = 5 * B                    # rows after  MaxPool2

    # ---- small f32 parameters (one slab) ----
    w1 = vec_ref[0:1, 0:C]        # BN-folded Conv1d(1,32,k=1) weight
    b1 = vec_ref[1:2, 0:C]        # BN-folded bias
    b2 = vec_ref[2:3, 0:C]
    b_in = vec_ref[3:4, :]        # fused LSTM biases, gate-interleaved (1, 8H)
    b_hd = vec_ref[4:5, 0:OUT]
    bwd = vec_ref[5:6, :] > 0.5   # lanes belonging to the backward direction

    # ---- bf16 weight slab ----
    w2t = mat_ref[0:C, 0:C]                                 # (32, 32)   conv2 weight
    wrec = mat_ref[C:C + 2 * H, :]                          # (64, 256)  block-diag recurrent
    w_in = mat_ref[C + 2 * H:C + 2 * H + 5 * C, :]          # (160, 256) input projection
    w_hd = mat_ref[C + 2 * H + 5 * C:C + 4 * H + 5 * C, 0:OUT]   # (64, 3) head weight

    # ---- conv path ----
    # x rows ordered (e1, e2, m, b): row = e1*n2 + e2*n3 + m*B + b holds x[b, 4m + 2*e2 + e1],
    # so each MaxPool1d(2) is a single half-vs-half maximum.
    h1 = x_ref[...] * w1 + b1                                            # (n1, C) conv1, f32 VPU
    p1 = jnp.maximum(jnp.maximum(h1[0:n2, :], h1[n2:n1, :]), 0.0)        # pool1 + ReLU
    q = jnp.dot(p1.astype(jnp.bfloat16), w2t, precision=_PREC,
                preferred_element_type=jnp.float32) + b2                 # conv2 (k=1)
    r = jnp.maximum(jnp.maximum(q[0:n3, :], q[n3:n2, :]), 0.0)           # pool2 + ReLU

    # ---- flatten + LSTM input projection: one K=160 dot ----
    feat = jnp.concatenate([r[m * B:(m + 1) * B, :] for m in range(5)], axis=1)   # (B, 5C)
    gx = jnp.dot(feat.astype(jnp.bfloat16), w_in, precision=_PREC,
                 preferred_element_type=jnp.float32) + b_in                        # (B, 8H)

    # ---- bidirectional LSTM, fully unrolled ----
    # Direction-interleaved gate layout: column = gate*2H + dir*H + h, gate order [i, f, g, o];
    # state = [hf | hb] (1, 2H).  One recurrent dot, one sigmoid, one tanh and one (1, 2H)
    # cell update per step cover both directions.
    hcat = jnp.zeros((1, 2 * H), jnp.float32)
    ccat = jnp.zeros((1, 2 * H), jnp.float32)
    hf_rows = [None] * T
    hb_rows = [None] * T
    for i in range(T):
        j = T - 1 - i                                                    # backward time index
        gin = jnp.where(bwd, gx[j:j + 1, :], gx[i:i + 1, :])             # off the critical path
        g = gin + jnp.dot(hcat.astype(jnp.bfloat16), wrec, precision=_PREC,
                          preferred_element_type=jnp.float32)            # (1, 8H)
        s = jax.nn.sigmoid(g)                       # one EUP pass (i, f, o lanes used)
        t = jnp.tanh(g)                             # one EUP pass (g lanes used)
        ccat = s[:, 2 * H:4 * H] * ccat + s[:, 0:2 * H] * t[:, 4 * H:6 * H]
        hcat = s[:, 6 * H:8 * H] * jnp.tanh(ccat)
        hf_rows[i] = hcat[:, 0:H]
        hb_rows[j] = hcat[:, H:2 * H]

    # ---- head: ReLU + Linear(2H, OUT) ----
    h_all = jnp.concatenate([jnp.concatenate(hf_rows, axis=0),
                             jnp.concatenate(hb_rows, axis=0)], axis=1)  # (T, 2H)
    h_all = jnp.maximum(h_all, 0.0)
    out_ref[...] = jnp.dot(h_all.astype(jnp.bfloat16), w_hd, precision=_PREC,
                           preferred_element_type=jnp.float32) + b_hd


# --------------------------------------------------------------------------------------
# Wrapper: parameter relayout (BN fold, gate interleave, wih row permutation, slab packing)
# + one pallas_call.
# --------------------------------------------------------------------------------------
def cnnlstm_forward(x, p):
    B, L = x.shape
    assert L == L_IN

    # Fold eval-mode BatchNorm1d(1) into the first k=1 conv (exact algebraic fold).
    inv = 1.0 / jnp.sqrt(p["bn_var"] + EPS)
    scale = (p["bn_gamma"] * inv).reshape(1, 1)
    shift = (p["bn_beta"] - p["bn_mean"] * p["bn_gamma"] * inv).reshape(1, 1)
    w1 = p["w1"].reshape(1, C)
    b1 = p["b1"].reshape(1, C)
    w1p = w1 * scale
    b1p = w1 * shift + b1

    # x relayout (pure layout plumbing, 640 B): row = e1*(10B) + e2*(5B) + m*B + b holds
    # x[b, 4m + 2*e2 + e1] -> both in-kernel MaxPool stages become single maxima.
    x_col = x.T.reshape(5, 2, 2, B).transpose(2, 1, 0, 3).reshape(20 * B, 1)

    # torch.flatten on (B, C, 5) is channel-major (feature = c*5 + m); the kernel builds
    # features position-major (m*C + c) -> permute the LSTM input-weight rows.
    def permute_wih(wih):                 # (4H, C*5) -> (C*5, 4H), row index = m*C + c
        return wih.T.reshape(C, 5, 4 * H).transpose(1, 0, 2).reshape(5 * C, 4 * H)

    # Direction-interleave gate columns: col = gate*2H + dir*H + h, gate order [i, f, g, o].
    def interleave_gates(a_f, a_b):
        parts = []
        for gi in range(4):
            parts.append(a_f[..., gi * H:(gi + 1) * H])
            parts.append(a_b[..., gi * H:(gi + 1) * H])
        return jnp.concatenate(parts, axis=-1)

    w_in = interleave_gates(permute_wih(p["wih_f"]), permute_wih(p["wih_b"]))     # (160, 8H)
    b_in = interleave_gates((p["bih_f"] + p["bhh_f"])[None, :],
                            (p["bih_b"] + p["bhh_b"])[None, :])                   # (1, 8H)

    # Block-diagonal recurrent weight: hf rows feed forward-gate lanes, hb rows backward.
    whhf_t = p["whh_f"].T
    whhb_t = p["whh_b"].T
    wrec = jnp.concatenate([interleave_gates(whhf_t, jnp.zeros_like(whhf_t)),
                            interleave_gates(jnp.zeros_like(whhb_t), whhb_t)],
                           axis=0)                                                # (2H, 8H)

    w2t = p["w2"][:, :, 0].T               # (C_in, C_out)
    w_head_t = p["w_head"].T               # (2H, OUT)

    # Pack parameters: one bf16 matrix slab + one f32 vector slab (3 input DMAs total).
    def pad_lanes(a):
        return jnp.pad(a, ((0, 0), (0, 8 * H - a.shape[1])))

    mat = jnp.concatenate([pad_lanes(w2t), wrec, w_in, pad_lanes(w_head_t)],
                          axis=0).astype(jnp.bfloat16)                            # (320, 8H)

    vec = jnp.zeros((8, 8 * H), jnp.float32)
    vec = vec.at[0, 0:C].set(w1p[0])
    vec = vec.at[1, 0:C].set(b1p[0])
    vec = vec.at[2, 0:C].set(p["b2"])
    vec = vec.at[3, :].set(b_in[0])
    vec = vec.at[4, 0:OUT].set(p["b_head"])
    vec = vec.at[5, :].set(jnp.tile(jnp.concatenate([jnp.zeros((H,), jnp.float32),
                                                     jnp.ones((H,), jnp.float32)]), 4))

    args = (x_col, vec, mat)

    def full(shape):
        return pl.BlockSpec(shape, lambda i: (0,) * len(shape))

    out = pl.pallas_call(
        fused_kernel,
        out_shape=jax.ShapeDtypeStruct((B, OUT), jnp.float32),
        grid=(1,),
        in_specs=[full(a.shape) for a in args],
        out_specs=full((B, OUT)),
        compiler_params=pltpu.CompilerParams(dimension_semantics=("arbitrary",)),
    )(*args)
    return out


# --------------------------------------------------------------------------------------
# Deterministic synthetic parameters (PyTorch shapes) and a pure-JAX f32 reference.
# --------------------------------------------------------------------------------------
def init_params(key):
    ks = jax.random.split(key, 18)
    n = lambda k, shape, s=0.1: jax.random.normal(k, shape, jnp.float32) * s
    p = {
        "bn_gamma": jax.random.uniform(ks[0], (1,), jnp.float32, 0.5, 1.5),
        "bn_beta": n(ks[1], (1,)),
        "bn_mean": n(ks[2], (1,)),
        "bn_var": jax.random.uniform(ks[3], (1,), jnp.float32, 0.5, 1.5),
        "w1": n(ks[4], (C, 1, 1)),
        "b1": n(ks[5], (C,)),
        "w2": n(ks[6], (C, C, 1)),
        "b2": n(ks[7], (C,)),
        "wih_f": n(ks[8], (4 * H, C * 5)),
        "whh_f": n(ks[9], (4 * H, H)),
        "bih_f": n(ks[10], (4 * H,)),
        "bhh_f": n(ks[11], (4 * H,)),
        "wih_b": n(ks[12], (4 * H, C * 5)),
        "whh_b": n(ks[13], (4 * H, H)),
        "bih_b": n(ks[14], (4 * H,)),
        "bhh_b": n(ks[15], (4 * H,)),
        "w_head": n(ks[16], (OUT, 2 * H)),
        "b_head": n(ks[17], (OUT,)),
    }
    return p


def reference_forward(x, p):
    B = x.shape[0]
    xb = (x - p["bn_mean"]) / jnp.sqrt(p["bn_var"] + EPS) * p["bn_gamma"] + p["bn_beta"]
    h = xb[:, None, :] * p["w1"].reshape(1, C, 1) + p["b1"].reshape(1, C, 1)    # (B,C,20)
    h = jnp.maximum(jnp.max(h.reshape(B, C, 10, 2), axis=-1), 0.0)
    h = jnp.einsum("oc,bcl->bol", p["w2"][:, :, 0], h) + p["b2"].reshape(1, C, 1)
    h = jnp.maximum(jnp.max(h.reshape(B, C, 5, 2), axis=-1), 0.0)
    feat = h.reshape(B, C * 5)

    def run_dir(wih, whh, bih, bhh, reverse):
        T = feat.shape[0]
        hs = [None] * T
        hh = jnp.zeros((H,), jnp.float32)
        cc = jnp.zeros((H,), jnp.float32)
        order = range(T - 1, -1, -1) if reverse else range(T)
        for t in order:
            g = wih @ feat[t] + bih + whh @ hh + bhh
            i = jax.nn.sigmoid(g[0:H])
            f = jax.nn.sigmoid(g[H:2 * H])
            gg = jnp.tanh(g[2 * H:3 * H])
            o = jax.nn.sigmoid(g[3 * H:4 * H])
            cc = f * cc + i * gg
            hh = o * jnp.tanh(cc)
            hs[t] = hh
        return jnp.stack(hs)

    hf = run_dir(p["wih_f"], p["whh_f"], p["bih_f"], p["bhh_f"], False)
    hb = run_dir(p["wih_b"], p["whh_b"], p["bih_b"], p["bhh_b"], True)
    hcat = jnp.maximum(jnp.concatenate([hf, hb], axis=1), 0.0)
    return hcat @ p["w_head"].T + p["b_head"]


if __name__ == "__main__":
    key = jax.random.PRNGKey(0)
    pkey, xkey = jax.random.split(key)
    params = init_params(pkey)

    B = 8                                    # batch rows -> LSTM sequence length (unbatched 2-D input)
    x = jax.random.normal(xkey, (B, L_IN), jnp.float32)

    out = jax.jit(cnnlstm_forward)(x, params)
    out = jax.block_until_ready(out)

    ref = reference_forward(x, params)
    assert out.shape == (B, OUT)
    # Kernel runs single-pass bf16 MXU dots (per perf review); validate against the f32
    # 'highest'-precision reference at a bf16-appropriate tolerance.
    np.testing.assert_allclose(np.asarray(out), np.asarray(ref), rtol=1e-2, atol=5e-3)
    print("KERNEL_OK")
</pallas_src>

<mosaic_0001>
module attributes {stable_mosaic.version = 11 : i64} {
  func.func @fused_kernel(%arg0: i32, %arg1: memref<160x1xf32, #tpu.memory_space<vmem>>, %arg2: memref<8x256xf32, #tpu.memory_space<vmem>>, %arg3: memref<320x256xbf16, #tpu.memory_space<vmem>>, %arg4: memref<8x3xf32, #tpu.memory_space<vmem>>) attributes {dimension_semantics = [#tpu.dimension_semantics<arbitrary>], iteration_bounds = array<i64: 1>, scalar_prefetch = 0 : i64, scratch_operands = 0 : i64, tpu.core_type = #tpu.core_type<tc>, window_params = [{pipeline_mode = #tpu.pipeline_mode<synchronous>, transform_indices = @transform_0, window_bounds = array<i64: 160, 1>}, {pipeline_mode = #tpu.pipeline_mode<synchronous>, transform_indices = @transform_1, window_bounds = array<i64: 8, 256>}, {pipeline_mode = #tpu.pipeline_mode<synchronous>, transform_indices = @transform_2, window_bounds = array<i64: 320, 256>}, {pipeline_mode = #tpu.pipeline_mode<synchronous>, transform_indices = @transform_3, window_bounds = array<i64: 8, 3>}]} {
    %c0 = arith.constant 0 : index
    %c0_0 = arith.constant 0 : index
    %0 = vector.load %arg2[%c0, %c0_0] : memref<8x256xf32, #tpu.memory_space<vmem>>, vector<1x32xf32>
    %c1 = arith.constant 1 : index
    %c0_1 = arith.constant 0 : index
    %1 = vector.load %arg2[%c1, %c0_1] : memref<8x256xf32, #tpu.memory_space<vmem>>, vector<1x32xf32>
    %c2 = arith.constant 2 : index
    %c0_2 = arith.constant 0 : index
    %2 = vector.load %arg2[%c2, %c0_2] : memref<8x256xf32, #tpu.memory_space<vmem>>, vector<1x32xf32>
    %c3 = arith.constant 3 : index
    %c0_3 = arith.constant 0 : index
    %3 = vector.load %arg2[%c3, %c0_3] : memref<8x256xf32, #tpu.memory_space<vmem>>, vector<1x256xf32>
    %c4 = arith.constant 4 : index
    %c0_4 = arith.constant 0 : index
    %4 = vector.load %arg2[%c4, %c0_4] : memref<8x256xf32, #tpu.memory_space<vmem>>, vector<1x3xf32>
    %c5 = arith.constant 5 : index
    %c0_5 = arith.constant 0 : index
    %5 = vector.load %arg2[%c5, %c0_5] : memref<8x256xf32, #tpu.memory_space<vmem>>, vector<1x256xf32>
    %cst = arith.constant 5.000000e-01 : f32
    %6 = vector.broadcast %cst : f32 to vector<1x256xf32>
    %7 = arith.cmpf ogt, %5, %6 : vector<1x256xf32>
    %c0_6 = arith.constant 0 : index
    %c0_7 = arith.constant 0 : index
    %8 = vector.load %arg3[%c0_6, %c0_7] : memref<320x256xbf16, #tpu.memory_space<vmem>>, vector<32x32xbf16>
    %c32 = arith.constant 32 : index
    %c0_8 = arith.constant 0 : index
    %9 = vector.load %arg3[%c32, %c0_8] : memref<320x256xbf16, #tpu.memory_space<vmem>>, vector<64x256xbf16>
    %c96 = arith.constant 96 : index
    %c0_9 = arith.constant 0 : index
    %10 = vector.load %arg3[%c96, %c0_9] : memref<320x256xbf16, #tpu.memory_space<vmem>>, vector<160x256xbf16>
    %c256 = arith.constant 256 : index
    %c0_10 = arith.constant 0 : index
    %11 = vector.load %arg3[%c256, %c0_10] : memref<320x256xbf16, #tpu.memory_space<vmem>>, vector<64x3xbf16>
    %c0_11 = arith.constant 0 : index
    %c0_12 = arith.constant 0 : index
    %12 = vector.load %arg1[%c0_11, %c0_12] : memref<160x1xf32, #tpu.memory_space<vmem>>, vector<160x1xf32>
    %13 = vector.broadcast %12 : vector<160x1xf32> to vector<160x32xf32>
    %14 = vector.broadcast %0 : vector<1x32xf32> to vector<160x32xf32>
    %15 = arith.mulf %13, %14 : vector<160x32xf32>
    %16 = vector.broadcast %1 : vector<1x32xf32> to vector<160x32xf32>
    %17 = arith.addf %15, %16 : vector<160x32xf32>
    %18 = vector.extract_strided_slice %17 {offsets = [0, 0], sizes = [80, 32], strides = [1, 1]} : vector<160x32xf32> to vector<80x32xf32>
    %19 = vector.extract_strided_slice %17 {offsets = [80, 0], sizes = [80, 32], strides = [1, 1]} : vector<160x32xf32> to vector<80x32xf32>
    %20 = arith.maximumf %18, %19 : vector<80x32xf32>
    %cst_13 = arith.constant 0.000000e+00 : f32
    %21 = vector.broadcast %cst_13 : f32 to vector<80x32xf32>
    %22 = arith.maximumf %20, %21 : vector<80x32xf32>
    %23 = arith.truncf %22 : vector<80x32xf32> to vector<80x32xbf16>
    %cst_14 = arith.constant dense<0.000000e+00> : vector<80x32xf32>
    %24 = tpu.matmul %23, %8, %cst_14 {dimension_numbers = #tpu.dot_dimension_numbers<[1], [0], [0], [1], [0, 0, 1, 1], [], []>} : vector<80x32xbf16>, vector<32x32xbf16>, vector<80x32xf32> -> vector<80x32xf32>
    %25 = vector.broadcast %2 : vector<1x32xf32> to vector<80x32xf32>
    %26 = arith.addf %24, %25 : vector<80x32xf32>
    %27 = vector.extract_strided_slice %26 {offsets = [0, 0], sizes = [40, 32], strides = [1, 1]} : vector<80x32xf32> to vector<40x32xf32>
    %28 = vector.extract_strided_slice %26 {offsets = [40, 0], sizes = [40, 32], strides = [1, 1]} : vector<80x32xf32> to vector<40x32xf32>
    %29 = arith.maximumf %27, %28 : vector<40x32xf32>
    %cst_15 = arith.constant 0.000000e+00 : f32
    %30 = vector.broadcast %cst_15 : f32 to vector<40x32xf32>
    %31 = arith.maximumf %29, %30 : vector<40x32xf32>
    %32 = vector.extract_strided_slice %31 {offsets = [0, 0], sizes = [8, 32], strides = [1, 1]} : vector<40x32xf32> to vector<8x32xf32>
    %33 = vector.extract_strided_slice %31 {offsets = [8, 0], sizes = [8, 32], strides = [1, 1]} : vector<40x32xf32> to vector<8x32xf32>
    %34 = vector.extract_strided_slice %31 {offsets = [16, 0], sizes = [8, 32], strides = [1, 1]} : vector<40x32xf32> to vector<8x32xf32>
    %35 = vector.extract_strided_slice %31 {offsets = [24, 0], sizes = [8, 32], strides = [1, 1]} : vector<40x32xf32> to vector<8x32xf32>
    %36 = vector.extract_strided_slice %31 {offsets = [32, 0], sizes = [8, 32], strides = [1, 1]} : vector<40x32xf32> to vector<8x32xf32>
    %37 = tpu.concatenate %32, %33, %34, %35, %36 in 1 : vector<8x32xf32>, vector<8x32xf32>, vector<8x32xf32>, vector<8x32xf32>, vector<8x32xf32> -> vector<8x160xf32>
    %38 = arith.truncf %37 : vector<8x160xf32> to vector<8x160xbf16>
    %cst_16 = arith.constant dense<0.000000e+00> : vector<8x256xf32>
    %39 = tpu.matmul %38, %10, %cst_16 {dimension_numbers = #tpu.dot_dimension_numbers<[1], [0], [0], [1], [0, 0, 1, 1], [], []>} : vector<8x160xbf16>, vector<160x256xbf16>, vector<8x256xf32> -> vector<8x256xf32>
    %40 = vector.broadcast %3 : vector<1x256xf32> to vector<8x256xf32>
    %41 = arith.addf %39, %40 : vector<8x256xf32>
    %cst_17 = arith.constant 0.000000e+00 : f32
    %42 = vector.broadcast %cst_17 : f32 to vector<1x64xf32>
    %cst_18 = arith.constant 0.000000e+00 : f32
    %43 = vector.broadcast %cst_18 : f32 to vector<1x64xf32>
    %44 = vector.extract_strided_slice %41 {offsets = [7, 0], sizes = [1, 256], strides = [1, 1]} : vector<8x256xf32> to vector<1x256xf32>
    %45 = vector.extract_strided_slice %41 {offsets = [0, 0], sizes = [1, 256], strides = [1, 1]} : vector<8x256xf32> to vector<1x256xf32>
    %46 = arith.select %7, %44, %45 : vector<1x256xi1>, vector<1x256xf32>
    %47 = arith.truncf %42 : vector<1x64xf32> to vector<1x64xbf16>
    %cst_19 = arith.constant dense<0.000000e+00> : vector<1x256xf32>
    %48 = tpu.matmul %47, %9, %cst_19 {dimension_numbers = #tpu.dot_dimension_numbers<[1], [0], [0], [1], [0, 0, 1, 1], [], []>} : vector<1x64xbf16>, vector<64x256xbf16>, vector<1x256xf32> -> vector<1x256xf32>
    %49 = arith.addf %46, %48 : vector<1x256xf32>
    %50 = arith.negf %49 : vector<1x256xf32>
    %51 = math.exp %50 : vector<1x256xf32>
    %cst_20 = arith.constant 1.000000e+00 : f32
    %52 = vector.broadcast %cst_20 : f32 to vector<1x256xf32>
    %53 = arith.addf %52, %51 : vector<1x256xf32>
    %54 = arith.divf %52, %53 : vector<1x256xf32>
    %55 = math.tanh %49 : vector<1x256xf32>
    %56 = vector.extract_strided_slice %54 {offsets = [0, 64], sizes = [1, 64], strides = [1, 1]} : vector<1x256xf32> to vector<1x64xf32>
    %57 = arith.mulf %56, %43 : vector<1x64xf32>
    %58 = vector.extract_strided_slice %54 {offsets = [0, 0], sizes = [1, 64], strides = [1, 1]} : vector<1x256xf32> to vector<1x64xf32>
    %59 = vector.extract_strided_slice %55 {offsets = [0, 128], sizes = [1, 64], strides = [1, 1]} : vector<1x256xf32> to vector<1x64xf32>
    %60 = arith.mulf %58, %59 : vector<1x64xf32>
    %61 = arith.addf %57, %60 : vector<1x64xf32>
    %62 = vector.extract_strided_slice %54 {offsets = [0, 192], sizes = [1, 64], strides = [1, 1]} : vector<1x256xf32> to vector<1x64xf32>
    %63 = math.tanh %61 : vector<1x64xf32>
    %64 = arith.mulf %62, %63 : vector<1x64xf32>
    %65 = vector.extract_strided_slice %64 {offsets = [0, 0], sizes = [1, 32], strides = [1, 1]} : vector<1x64xf32> to vector<1x32xf32>
    %66 = vector.extract_strided_slice %64 {offsets = [0, 32], sizes = [1, 32], strides = [1, 1]} : vector<1x64xf32> to vector<1x32xf32>
    %67 = vector.extract_strided_slice %41 {offsets = [6, 0], sizes = [1, 256], strides = [1, 1]} : vector<8x256xf32> to vector<1x256xf32>
    %68 = vector.extract_strided_slice %41 {offsets = [1, 0], sizes = [1, 256], strides = [1, 1]} : vector<8x256xf32> to vector<1x256xf32>
    %69 = arith.select %7, %67, %68 : vector<1x256xi1>, vector<1x256xf32>
    %70 = arith.truncf %64 : vector<1x64xf32> to vector<1x64xbf16>
    %cst_21 = arith.constant dense<0.000000e+00> : vector<1x256xf32>
    %71 = tpu.matmul %70, %9, %cst_21 {dimension_numbers = #tpu.dot_dimension_numbers<[1], [0], [0], [1], [0, 0, 1, 1], [], []>} : vector<1x64xbf16>, vector<64x256xbf16>, vector<1x256xf32> -> vector<1x256xf32>
    %72 = arith.addf %69, %71 : vector<1x256xf32>
    %73 = arith.negf %72 : vector<1x256xf32>
    %74 = math.exp %73 : vector<1x256xf32>
    %cst_22 = arith.constant 1.000000e+00 : f32
    %75 = vector.broadcast %cst_22 : f32 to vector<1x256xf32>
    %76 = arith.addf %75, %74 : vector<1x256xf32>
    %77 = arith.divf %75, %76 : vector<1x256xf32>
    %78 = math.tanh %72 : vector<1x256xf32>
    %79 = vector.extract_strided_slice %77 {offsets = [0, 64], sizes = [1, 64], strides = [1, 1]} : vector<1x256xf32> to vector<1x64xf32>
    %80 = arith.mulf %79, %61 : vector<1x64xf32>
    %81 = vector.extract_strided_slice %77 {offsets = [0, 0], sizes = [1, 64], strides = [1, 1]} : vector<1x256xf32> to vector<1x64xf32>
    %82 = vector.extract_strided_slice %78 {offsets = [0, 128], sizes = [1, 64], strides = [1, 1]} : vector<1x256xf32> to vector<1x64xf32>
    %83 = arith.mulf %81, %82 : vector<1x64xf32>
    %84 = arith.addf %80, %83 : vector<1x64xf32>
    %85 = vector.extract_strided_slice %77 {offsets = [0, 192], sizes = [1, 64], strides = [1, 1]} : vector<1x256xf32> to vector<1x64xf32>
    %86 = math.tanh %84 : vector<1x64xf32>
    %87 = arith.mulf %85, %86 : vector<1x64xf32>
    %88 = vector.extract_strided_slice %87 {offsets = [0, 0], sizes = [1, 32], strides = [1, 1]} : vector<1x64xf32> to vector<1x32xf32>
    %89 = vector.extract_strided_slice %87 {offsets = [0, 32], sizes = [1, 32], strides = [1, 1]} : vector<1x64xf32> to vector<1x32xf32>
    %90 = vector.extract_strided_slice %41 {offsets = [5, 0], sizes = [1, 256], strides = [1, 1]} : vector<8x256xf32> to vector<1x256xf32>
    %91 = vector.extract_strided_slice %41 {offsets = [2, 0], sizes = [1, 256], strides = [1, 1]} : vector<8x256xf32> to vector<1x256xf32>
    %92 = arith.select %7, %90, %91 : vector<1x256xi1>, vector<1x256xf32>
    %93 = arith.truncf %87 : vector<1x64xf32> to vector<1x64xbf16>
    %cst_23 = arith.constant dense<0.000000e+00> : vector<1x256xf32>
    %94 = tpu.matmul %93, %9, %cst_23 {dimension_numbers = #tpu.dot_dimension_numbers<[1], [0], [0], [1], [0, 0, 1, 1], [], []>} : vector<1x64xbf16>, vector<64x256xbf16>, vector<1x256xf32> -> vector<1x256xf32>
    %95 = arith.addf %92, %94 : vector<1x256xf32>
    %96 = arith.negf %95 : vector<1x256xf32>
    %97 = math.exp %96 : vector<1x256xf32>
    %cst_24 = arith.constant 1.000000e+00 : f32
    %98 = vector.broadcast %cst_24 : f32 to vector<1x256xf32>
    %99 = arith.addf %98, %97 : vector<1x256xf32>
    %100 = arith.divf %98, %99 : vector<1x256xf32>
    %101 = math.tanh %95 : vector<1x256xf32>
    %102 = vector.extract_strided_slice %100 {offsets = [0, 64], sizes = [1, 64], strides = [1, 1]} : vector<1x256xf32> to vector<1x64xf32>
    %103 = arith.mulf %102, %84 : vector<1x64xf32>
    %104 = vector.extract_strided_slice %100 {offsets = [0, 0], sizes = [1, 64], strides = [1, 1]} : vector<1x256xf32> to vector<1x64xf32>
    %105 = vector.extract_strided_slice %101 {offsets = [0, 128], sizes = [1, 64], strides = [1, 1]} : vector<1x256xf32> to vector<1x64xf32>
    %106 = arith.mulf %104, %105 : vector<1x64xf32>
    %107 = arith.addf %103, %106 : vector<1x64xf32>
    %108 = vector.extract_strided_slice %100 {offsets = [0, 192], sizes = [1, 64], strides = [1, 1]} : vector<1x256xf32> to vector<1x64xf32>
    %109 = math.tanh %107 : vector<1x64xf32>
    %110 = arith.mulf %108, %109 : vector<1x64xf32>
    %111 = vector.extract_strided_slice %110 {offsets = [0, 0], sizes = [1, 32], strides = [1, 1]} : vector<1x64xf32> to vector<1x32xf32>
    %112 = vector.extract_strided_slice %110 {offsets = [0, 32], sizes = [1, 32], strides = [1, 1]} : vector<1x64xf32> to vector<1x32xf32>
    %113 = vector.extract_strided_slice %41 {offsets = [4, 0], sizes = [1, 256], strides = [1, 1]} : vector<8x256xf32> to vector<1x256xf32>
    %114 = vector.extract_strided_slice %41 {offsets = [3, 0], sizes = [1, 256], strides = [1, 1]} : vector<8x256xf32> to vector<1x256xf32>
    %115 = arith.select %7, %113, %114 : vector<1x256xi1>, vector<1x256xf32>
    %116 = arith.truncf %110 : vector<1x64xf32> to vector<1x64xbf16>
    %cst_25 = arith.constant dense<0.000000e+00> : vector<1x256xf32>
    %117 = tpu.matmul %116, %9, %cst_25 {dimension_numbers = #tpu.dot_dimension_numbers<[1], [0], [0], [1], [0, 0, 1, 1], [], []>} : vector<1x64xbf16>, vector<64x256xbf16>, vector<1x256xf32> -> vector<1x256xf32>
    %118 = arith.addf %115, %117 : vector<1x256xf32>
    %119 = arith.negf %118 : vector<1x256xf32>
    %120 = math.exp %119 : vector<1x256xf32>
    %cst_26 = arith.constant 1.000000e+00 : f32
    %121 = vector.broadcast %cst_26 : f32 to vector<1x256xf32>
    %122 = arith.addf %121, %120 : vector<1x256xf32>
    %123 = arith.divf %121, %122 : vector<1x256xf32>
    %124 = math.tanh %118 : vector<1x256xf32>
    %125 = vector.extract_strided_slice %123 {offsets = [0, 64], sizes = [1, 64], strides = [1, 1]} : vector<1x256xf32> to vector<1x64xf32>
    %126 = arith.mulf %125, %107 : vector<1x64xf32>
    %127 = vector.extract_strided_slice %123 {offsets = [0, 0], sizes = [1, 64], strides = [1, 1]} : vector<1x256xf32> to vector<1x64xf32>
    %128 = vector.extract_strided_slice %124 {offsets = [0, 128], sizes = [1, 64], strides = [1, 1]} : vector<1x256xf32> to vector<1x64xf32>
    %129 = arith.mulf %127, %128 : vector<1x64xf32>
    %130 = arith.addf %126, %129 : vector<1x64xf32>
    %131 = vector.extract_strided_slice %123 {offsets = [0, 192], sizes = [1, 64], strides = [1, 1]} : vector<1x256xf32> to vector<1x64xf32>
    %132 = math.tanh %130 : vector<1x64xf32>
    %133 = arith.mulf %131, %132 : vector<1x64xf32>
    %134 = vector.extract_strided_slice %133 {offsets = [0, 0], sizes = [1, 32], strides = [1, 1]} : vector<1x64xf32> to vector<1x32xf32>
    %135 = vector.extract_strided_slice %133 {offsets = [0, 32], sizes = [1, 32], strides = [1, 1]} : vector<1x64xf32> to vector<1x32xf32>
    %136 = vector.extract_strided_slice %41 {offsets = [3, 0], sizes = [1, 256], strides = [1, 1]} : vector<8x256xf32> to vector<1x256xf32>
    %137 = vector.extract_strided_slice %41 {offsets = [4, 0], sizes = [1, 256], strides = [1, 1]} : vector<8x256xf32> to vector<1x256xf32>
    %138 = arith.select %7, %136, %137 : vector<1x256xi1>, vector<1x256xf32>
    %139 = arith.truncf %133 : vector<1x64xf32> to vector<1x64xbf16>
    %cst_27 = arith.constant dense<0.000000e+00> : vector<1x256xf32>
    %140 = tpu.matmul %139, %9, %cst_27 {dimension_numbers = #tpu.dot_dimension_numbers<[1], [0], [0], [1], [0, 0, 1, 1], [], []>} : vector<1x64xbf16>, vector<64x256xbf16>, vector<1x256xf32> -> vector<1x256xf32>
    %141 = arith.addf %138, %140 : vector<1x256xf32>
    %142 = arith.negf %141 : vector<1x256xf32>
    %143 = math.exp %142 : vector<1x256xf32>
    %cst_28 = arith.constant 1.000000e+00 : f32
    %144 = vector.broadcast %cst_28 : f32 to vector<1x256xf32>
    %145 = arith.addf %144, %143 : vector<1x256xf32>
    %146 = arith.divf %144, %145 : vector<1x256xf32>
    %147 = math.tanh %141 : vector<1x256xf32>
    %148 = vector.extract_strided_slice %146 {offsets = [0, 64], sizes = [1, 64], strides = [1, 1]} : vector<1x256xf32> to vector<1x64xf32>
    %149 = arith.mulf %148, %130 : vector<1x64xf32>
    %150 = vector.extract_strided_slice %146 {offsets = [0, 0], sizes = [1, 64], strides = [1, 1]} : vector<1x256xf32> to vector<1x64xf32>
    %151 = vector.extract_strided_slice %147 {offsets = [0, 128], sizes = [1, 64], strides = [1, 1]} : vector<1x256xf32> to vector<1x64xf32>
    %152 = arith.mulf %150, %151 : vector<1x64xf32>
    %153 = arith.addf %149, %152 : vector<1x64xf32>
    %154 = vector.extract_strided_slice %146 {offsets = [0, 192], sizes = [1, 64], strides = [1, 1]} : vector<1x256xf32> to vector<1x64xf32>
    %155 = math.tanh %153 : vector<1x64xf32>
    %156 = arith.mulf %154, %155 : vector<1x64xf32>
    %157 = vector.extract_strided_slice %156 {offsets = [0, 0], sizes = [1, 32], strides = [1, 1]} : vector<1x64xf32> to vector<1x32xf32>
    %158 = vector.extract_strided_slice %156 {offsets = [0, 32], sizes = [1, 32], strides = [1, 1]} : vector<1x64xf32> to vector<1x32xf32>
    %159 = vector.extract_strided_slice %41 {offsets = [2, 0], sizes = [1, 256], strides = [1, 1]} : vector<8x256xf32> to vector<1x256xf32>
    %160 = vector.extract_strided_slice %41 {offsets = [5, 0], sizes = [1, 256], strides = [1, 1]} : vector<8x256xf32> to vector<1x256xf32>
    %161 = arith.select %7, %159, %160 : vector<1x256xi1>, vector<1x256xf32>
    %162 = arith.truncf %156 : vector<1x64xf32> to vector<1x64xbf16>
    %cst_29 = arith.constant dense<0.000000e+00> : vector<1x256xf32>
    %163 = tpu.matmul %162, %9, %cst_29 {dimension_numbers = #tpu.dot_dimension_numbers<[1], [0], [0], [1], [0, 0, 1, 1], [], []>} : vector<1x64xbf16>, vector<64x256xbf16>, vector<1x256xf32> -> vector<1x256xf32>
    %164 = arith.addf %161, %163 : vector<1x256xf32>
    %165 = arith.negf %164 : vector<1x256xf32>
    %166 = math.exp %165 : vector<1x256xf32>
    %cst_30 = arith.constant 1.000000e+00 : f32
    %167 = vector.broadcast %cst_30 : f32 to vector<1x256xf32>
    %168 = arith.addf %167, %166 : vector<1x256xf32>
    %169 = arith.divf %167, %168 : vector<1x256xf32>
    %170 = math.tanh %164 : vector<1x256xf32>
    %171 = vector.extract_strided_slice %169 {offsets = [0, 64], sizes = [1, 64], strides = [1, 1]} : vector<1x256xf32> to vector<1x64xf32>
    %172 = arith.mulf %171, %153 : vector<1x64xf32>
    %173 = vector.extract_strided_slice %169 {offsets = [0, 0], sizes = [1, 64], strides = [1, 1]} : vector<1x256xf32> to vector<1x64xf32>
    %174 = vector.extract_strided_slice %170 {offsets = [0, 128], sizes = [1, 64], strides = [1, 1]} : vector<1x256xf32> to vector<1x64xf32>
    %175 = arith.mulf %173, %174 : vector<1x64xf32>
    %176 = arith.addf %172, %175 : vector<1x64xf32>
    %177 = vector.extract_strided_slice %169 {offsets = [0, 192], sizes = [1, 64], strides = [1, 1]} : vector<1x256xf32> to vector<1x64xf32>
    %178 = math.tanh %176 : vector<1x64xf32>
    %179 = arith.mulf %177, %178 : vector<1x64xf32>
    %180 = vector.extract_strided_slice %179 {offsets = [0, 0], sizes = [1, 32], strides = [1, 1]} : vector<1x64xf32> to vector<1x32xf32>
    %181 = vector.extract_strided_slice %179 {offsets = [0, 32], sizes = [1, 32], strides = [1, 1]} : vector<1x64xf32> to vector<1x32xf32>
    %182 = vector.extract_strided_slice %41 {offsets = [1, 0], sizes = [1, 256], strides = [1, 1]} : vector<8x256xf32> to vector<1x256xf32>
    %183 = vector.extract_strided_slice %41 {offsets = [6, 0], sizes = [1, 256], strides = [1, 1]} : vector<8x256xf32> to vector<1x256xf32>
    %184 = arith.select %7, %182, %183 : vector<1x256xi1>, vector<1x256xf32>
    %185 = arith.truncf %179 : vector<1x64xf32> to vector<1x64xbf16>
    %cst_31 = arith.constant dense<0.000000e+00> : vector<1x256xf32>
    %186 = tpu.matmul %185, %9, %cst_31 {dimension_numbers = #tpu.dot_dimension_numbers<[1], [0], [0], [1], [0, 0, 1, 1], [], []>} : vector<1x64xbf16>, vector<64x256xbf16>, vector<1x256xf32> -> vector<1x256xf32>
    %187 = arith.addf %184, %186 : vector<1x256xf32>
    %188 = arith.negf %187 : vector<1x256xf32>
    %189 = math.exp %188 : vector<1x256xf32>
    %cst_32 = arith.constant 1.000000e+00 : f32
    %190 = vector.broadcast %cst_32 : f32 to vector<1x256xf32>
    %191 = arith.addf %190, %189 : vector<1x256xf32>
    %192 = arith.divf %190, %191 : vector<1x256xf32>
    %193 = math.tanh %187 : vector<1x256xf32>
    %194 = vector.extract_strided_slice %192 {offsets = [0, 64], sizes = [1, 64], strides = [1, 1]} : vector<1x256xf32> to vector<1x64xf32>
    %195 = arith.mulf %194, %176 : vector<1x64xf32>
    %196 = vector.extract_strided_slice %192 {offsets = [0, 0], sizes = [1, 64], strides = [1, 1]} : vector<1x256xf32> to vector<1x64xf32>
    %197 = vector.extract_strided_slice %193 {offsets = [0, 128], sizes = [1, 64], strides = [1, 1]} : vector<1x256xf32> to vector<1x64xf32>
    %198 = arith.mulf %196, %197 : vector<1x64xf32>
    %199 = arith.addf %195, %198 : vector<1x64xf32>
    %200 = vector.extract_strided_slice %192 {offsets = [0, 192], sizes = [1, 64], strides = [1, 1]} : vector<1x256xf32> to vector<1x64xf32>
    %201 = math.tanh %199 : vector<1x64xf32>
    %202 = arith.mulf %200, %201 : vector<1x64xf32>
    %203 = vector.extract_strided_slice %202 {offsets = [0, 0], sizes = [1, 32], strides = [1, 1]} : vector<1x64xf32> to vector<1x32xf32>
    %204 = vector.extract_strided_slice %202 {offsets = [0, 32], sizes = [1, 32], strides = [1, 1]} : vector<1x64xf32> to vector<1x32xf32>
    %205 = vector.extract_strided_slice %41 {offsets = [0, 0], sizes = [1, 256], strides = [1, 1]} : vector<8x256xf32> to vector<1x256xf32>
    %206 = vector.extract_strided_slice %41 {offsets = [7, 0], sizes = [1, 256], strides = [1, 1]} : vector<8x256xf32> to vector<1x256xf32>
    %207 = arith.select %7, %205, %206 : vector<1x256xi1>, vector<1x256xf32>
    %208 = arith.truncf %202 : vector<1x64xf32> to vector<1x64xbf16>
    %cst_33 = arith.constant dense<0.000000e+00> : vector<1x256xf32>
    %209 = tpu.matmul %208, %9, %cst_33 {dimension_numbers = #tpu.dot_dimension_numbers<[1], [0], [0], [1], [0, 0, 1, 1], [], []>} : vector<1x64xbf16>, vector<64x256xbf16>, vector<1x256xf32> -> vector<1x256xf32>
    %210 = arith.addf %207, %209 : vector<1x256xf32>
    %211 = arith.negf %210 : vector<1x256xf32>
    %212 = math.exp %211 : vector<1x256xf32>
    %cst_34 = arith.constant 1.000000e+00 : f32
    %213 = vector.broadcast %cst_34 : f32 to vector<1x256xf32>
    %214 = arith.addf %213, %212 : vector<1x256xf32>
    %215 = arith.divf %213, %214 : vector<1x256xf32>
    %216 = math.tanh %210 : vector<1x256xf32>
    %217 = vector.extract_strided_slice %215 {offsets = [0, 64], sizes = [1, 64], strides = [1, 1]} : vector<1x256xf32> to vector<1x64xf32>
    %218 = arith.mulf %217, %199 : vector<1x64xf32>
    %219 = vector.extract_strided_slice %215 {offsets = [0, 0], sizes = [1, 64], strides = [1, 1]} : vector<1x256xf32> to vector<1x64xf32>
    %220 = vector.extract_strided_slice %216 {offsets = [0, 128], sizes = [1, 64], strides = [1, 1]} : vector<1x256xf32> to vector<1x64xf32>
    %221 = arith.mulf %219, %220 : vector<1x64xf32>
    %222 = arith.addf %218, %221 : vector<1x64xf32>
    %223 = vector.extract_strided_slice %215 {offsets = [0, 192], sizes = [1, 64], strides = [1, 1]} : vector<1x256xf32> to vector<1x64xf32>
    %224 = math.tanh %222 : vector<1x64xf32>
    %225 = arith.mulf %223, %224 : vector<1x64xf32>
    %226 = vector.extract_strided_slice %225 {offsets = [0, 0], sizes = [1, 32], strides = [1, 1]} : vector<1x64xf32> to vector<1x32xf32>
    %227 = vector.extract_strided_slice %225 {offsets = [0, 32], sizes = [1, 32], strides = [1, 1]} : vector<1x64xf32> to vector<1x32xf32>
    %228 = tpu.concatenate %65, %88, %111, %134, %157, %180, %203, %226 in 0 : vector<1x32xf32>, vector<1x32xf32>, vector<1x32xf32>, vector<1x32xf32>, vector<1x32xf32>, vector<1x32xf32>, vector<1x32xf32>, vector<1x32xf32> -> vector<8x32xf32>
    %229 = tpu.concatenate %227, %204, %181, %158, %135, %112, %89, %66 in 0 : vector<1x32xf32>, vector<1x32xf32>, vector<1x32xf32>, vector<1x32xf32>, vector<1x32xf32>, vector<1x32xf32>, vector<1x32xf32>, vector<1x32xf32> -> vector<8x32xf32>
    %230 = tpu.concatenate %228, %229 in 1 : vector<8x32xf32>, vector<8x32xf32> -> vector<8x64xf32>
    %cst_35 = arith.constant 0.000000e+00 : f32
    %231 = vector.broadcast %cst_35 : f32 to vector<8x64xf32>
    %232 = arith.maximumf %230, %231 : vector<8x64xf32>
    %233 = arith.truncf %232 : vector<8x64xf32> to vector<8x64xbf16>
    %cst_36 = arith.constant dense<0.000000e+00> : vector<8x3xf32>
    %234 = tpu.matmul %233, %11, %cst_36 {dimension_numbers = #tpu.dot_dimension_numbers<[1], [0], [0], [1], [0, 0, 1, 1], [], []>} : vector<8x64xbf16>, vector<64x3xbf16>, vector<8x3xf32> -> vector<8x3xf32>
    %235 = vector.broadcast %4 : vector<1x3xf32> to vector<8x3xf32>
    %236 = arith.addf %234, %235 : vector<8x3xf32>
    %c0_37 = arith.constant 0 : index
    %c0_38 = arith.constant 0 : index
    %237 = vector.load %arg4[%c0_37, %c0_38] : memref<8x3xf32, #tpu.memory_space<vmem>>, vector<8x3xf32>
    tpu.vector_store %arg4[%c0_37, %c0_38], %236 {strides = array<i32>} : memref<8x3xf32, #tpu.memory_space<vmem>>, vector<8x3xf32>,
    return
  }
  func.func @transform_0(%arg0: i32) -> (i32, i32) {
    %c0_i32 = arith.constant 0 : i32
    %c0_i32_0 = arith.constant 0 : i32
    %c0_i32_1 = arith.constant 0 : i32
    return %c0_i32, %c0_i32_0 : i32, i32
  }
  func.func @transform_1(%arg0: i32) -> (i32, i32) {
    %c0_i32 = arith.constant 0 : i32
    %c0_i32_0 = arith.constant 0 : i32
    %c0_i32_1 = arith.constant 0 : i32
    return %c0_i32, %c0_i32_0 : i32, i32
  }
  func.func @transform_2(%arg0: i32) -> (i32, i32) {
    %c0_i32 = arith.constant 0 : i32
    %c0_i32_0 = arith.constant 0 : i32
    %c0_i32_1 = arith.constant 0 : i32
    return %c0_i32, %c0_i32_0 : i32, i32
  }
  func.func @transform_3(%arg0: i32) -> (i32, i32) {
    %c0_i32 = arith.constant 0 : i32
    %c0_i32_0 = arith.constant 0 : i32
    %c0_i32_1 = arith.constant 0 : i32
    return %c0_i32, %c0_i32_0 : i32, i32
  }
}

</mosaic_0001>

<llo_original>
// kernel: tile.6
$region0: #{tile.6}
  #allocation0 [shape = 's32[1]{0}', space=sflag, size = 0x4, scoped, tag = 'scoped memory for tile.6']
  %s0 = inlined_call_operand.vmem [shape: f32[64], index: 0, kind: input, shape index: {}]
  %s1 = inlined_call_operand.vmem [shape: f32[4,64], index: 1, kind: output, shape index: {}]
  // Predicated region
  $region2: #{tile.6} parent=0 // pred_check
    _
  $region3: #{tile.6} parent=0 // pred_check_branch
    %3 = sbr.rel (0) target = $region5
  $region4: #{tile.6} parent=0 // pred_region
    _
  $region5: #{tile.6} parent=0 // pred_fallthru
    _
  %v4 = vld [vmem:[%s0] ss:$0 sm:$0xff]
  %5 = vst [vmem:[%s1] sm:$0xf] %v4

// kernel: cnnlstm_forward.1
$region0: #{cnnlstm_forward.1}
  #allocation0 [shape = 'u32[]', space=smem, size = 0x4, offset = 0x4, fixed_abs, tag = 'smem constant byte address 0x4 - core index']
  #allocation1 [shape = 'u32[72,128]{1,0:T(1,128)}', space=vmem, size = 0x9000, scoped, tag = 'internal scratch']
  %s0 = inlined_call_operand.vmem [shape: f32[160,1], index: 0, kind: input, shape index: {}]
  %s1 = inlined_call_operand.vmem [shape: f32[8,256], index: 1, kind: input, shape index: {}]
  %s2 = inlined_call_operand.vmem [shape: bf16[320,256], index: 2, kind: input, shape index: {}]
  %s3 = inlined_call_operand.vmem [shape: f32[8,3], index: 3, kind: output, shape index: {}]
  %s4 = sld [smem:[#allocation0]]
  $region22: #{cnnlstm_forward.1} parent=0
    _
  %s6 = ssub.s32 1, %s4
  %s7 = scalar_select 0, %s6, %s4
  // Predicated region
  $region2: #{cnnlstm_forward.1} parent=0 // pred_check
    _
  $region3: #{cnnlstm_forward.1} parent=0 // pred_check_branch
    %9 = sbr.rel (0) target = $region5
  $region4: #{cnnlstm_forward.1} parent=0 // pred_region
    _
  $region5: #{cnnlstm_forward.1} parent=0 // pred_fallthru
    _
  // Predicated region
  $region6: #{cnnlstm_forward.1} parent=0 // pred_check
    _
  $region7: #{cnnlstm_forward.1} parent=0 // pred_check_branch
    %11 = sbr.rel (0) target = $region9
  $region8: #{cnnlstm_forward.1} parent=0 // pred_region
    _
  $region9: #{cnnlstm_forward.1} parent=0 // pred_fallthru
    _
  // Predicated region
  $region10: #{cnnlstm_forward.1} parent=0 // pred_check
    _
  $region11: #{cnnlstm_forward.1} parent=0 // pred_check_branch
    %13 = sbr.rel (0) target = $region13
  $region12: #{cnnlstm_forward.1} parent=0 // pred_region
    _
  $region13: #{cnnlstm_forward.1} parent=0 // pred_fallthru
    _
  %v15 = vld [vmem:[%s1] ss:$0 sm:$0xff]
  %v16 = vld [vmem:[%s1 + $0x1] ss:$0 sm:$0xff]
  %v17 = vld [vmem:[%s1 + $0x2] ss:$0 sm:$0xff]
  %s18 = scalar_lea.vmem %s1, 3
  %v19 = vld [vmem:[%s18] ss:$8 sm:$0x3]
  %v20 = vld [vmem:[%s1 + $0x4] ss:$0 sm:$0xff]
  %s21 = scalar_lea.vmem %s1, 5
  %v22 = vld [vmem:[%s21] ss:$8 sm:$0x3]
  %vm23 = vcmp.gt.f32.partialorder %v22, 0.5
  %v24 = vld [vmem:[%s2] sm:$0xf]
  %v25 = vld [vmem:[%s2 + $0x8] sm:$0xf]
  %v26 = vld [vmem:[%s2 + $0x10] sm:$0xf]
  %v27 = vld [vmem:[%s2 + $0x18] sm:$0xf]
  %v28 = vld [vmem:[%s2 + $0x20] sm:$0xff]
  %v29 = vld [vmem:[%s2 + $0x28] sm:$0xff]
  %v30 = vld [vmem:[%s2 + $0x30] sm:$0xff]
  %v31 = vld [vmem:[%s2 + $0x38] sm:$0xff]
  %v32 = vld [vmem:[%s2 + $0x40] sm:$0xff]
  %v33 = vld [vmem:[%s2 + $0x48] sm:$0xff]
  %v34 = vld [vmem:[%s2 + $0x50] sm:$0xff]
  %v35 = vld [vmem:[%s2 + $0x58] sm:$0xff]
  %v36 = vld [vmem:[%s2 + $0x60] sm:$0xff]
  %v37 = vld [vmem:[%s2 + $0x68] sm:$0xff]
  %v38 = vld [vmem:[%s2 + $0x70] sm:$0xff]
  %v39 = vld [vmem:[%s2 + $0x78] sm:$0xff]
  %v40 = vld [vmem:[%s2 + $0x80] sm:$0xff]
  %v41 = vld [vmem:[%s2 + $0x88] sm:$0xff]
  %v42 = vld [vmem:[%s2 + $0x90] sm:$0xff]
  %v43 = vld [vmem:[%s2 + $0x98] sm:$0xff]
  %v44 = vld [vmem:[%s2 + $0xa0] sm:$0xff]
  %v45 = vld [vmem:[%s2 + $0xa8] sm:$0xff]
  %v46 = vld [vmem:[%s2 + $0xb0] sm:$0xff]
  %v47 = vld [vmem:[%s2 + $0xb8] sm:$0xff]
  %v48 = vld [vmem:[%s2 + $0xc0] sm:$0xff]
  %v49 = vld [vmem:[%s2 + $0xc8] sm:$0xff]
  %v50 = vld [vmem:[%s2 + $0xd0] sm:$0xff]
  %v51 = vld [vmem:[%s2 + $0xd8] sm:$0xff]
  %v52 = vld [vmem:[%s2 + $0xe0] sm:$0xff]
  %v53 = vld [vmem:[%s2 + $0xe8] sm:$0xff]
  %v54 = vld [vmem:[%s2 + $0xf0] sm:$0xff]
  %v55 = vld [vmem:[%s2 + $0xf8] sm:$0xff]
  %v56 = vld [vmem:[%s2 + $0x100] sm:$0xf]
  %v57 = vld [vmem:[%s2 + $0x108] sm:$0xf]
  %v58 = vld [vmem:[%s2 + $0x110] sm:$0xf]
  %v59 = vld [vmem:[%s2 + $0x118] sm:$0xf]
  %v60 = vld [vmem:[%s2 + $0x120] sm:$0xf]
  %v61 = vld [vmem:[%s2 + $0x128] sm:$0xf]
  %v62 = vld [vmem:[%s2 + $0x130] sm:$0xf]
  %v63 = vld [vmem:[%s2 + $0x138] sm:$0xf]
  %v64 = vld [vmem:[%s0] sm:$0xff]
  %v65 = vld [vmem:[%s0 + $0x8] sm:$0xff]
  %v66 = vld [vmem:[%s0 + $0x10] sm:$0xff]
  %v67 = vld [vmem:[%s0 + $0x18] sm:$0xff]
  %v68 = vld [vmem:[%s0 + $0x20] sm:$0xff]
  %v69 = vld [vmem:[%s0 + $0x28] sm:$0xff]
  %v70 = vld [vmem:[%s0 + $0x30] sm:$0xff]
  %v71 = vld [vmem:[%s0 + $0x38] sm:$0xff]
  %v72 = vld [vmem:[%s0 + $0x40] sm:$0xff]
  %v73 = vld [vmem:[%s0 + $0x48] sm:$0xff]
  %v74 = vld [vmem:[%s0 + $0x50] sm:$0xff]
  %v75 = vld [vmem:[%s0 + $0x58] sm:$0xff]
  %v76 = vld [vmem:[%s0 + $0x60] sm:$0xff]
  %v77 = vld [vmem:[%s0 + $0x68] sm:$0xff]
  %v78 = vld [vmem:[%s0 + $0x70] sm:$0xff]
  %v79 = vld [vmem:[%s0 + $0x78] sm:$0xff]
  %v80 = vld [vmem:[%s0 + $0x80] sm:$0xff]
  %v81 = vld [vmem:[%s0 + $0x88] sm:$0xff]
  %v82 = vld [vmem:[%s0 + $0x90] sm:$0xff]
  %v83 = vld [vmem:[%s0 + $0x98] sm:$0xff]
  %85 = vset.pattern.permute.xlu0 0
  %86 = vperm.xlu0 %85, %v64
  %v87 = vpop.permute.xlu0 %86
  %90 = vset.pattern.permute.xlu0 0
  %91 = vperm.xlu0 %90, %v65
  %v92 = vpop.permute.xlu0 %91
  %95 = vset.pattern.permute.xlu0 0
  %96 = vperm.xlu0 %95, %v66
  %v97 = vpop.permute.xlu0 %96
  %100 = vset.pattern.permute.xlu0 0
  %101 = vperm.xlu0 %100, %v67
  %v102 = vpop.permute.xlu0 %101
  %105 = vset.pattern.permute.xlu0 0
  %106 = vperm.xlu0 %105, %v68
  %v107 = vpop.permute.xlu0 %106
  %110 = vset.pattern.permute.xlu0 0
  %111 = vperm.xlu0 %110, %v69
  %v112 = vpop.permute.xlu0 %111
  %115 = vset.pattern.permute.xlu0 0
  %116 = vperm.xlu0 %115, %v70
  %v117 = vpop.permute.xlu0 %116
  %120 = vset.pattern.permute.xlu0 0
  %121 = vperm.xlu0 %120, %v71
  %v122 = vpop.permute.xlu0 %121
  %125 = vset.pattern.permute.xlu0 0
  %126 = vperm.xlu0 %125, %v72
  %v127 = vpop.permute.xlu0 %126
  %130 = vset.pattern.permute.xlu0 0
  %131 = vperm.xlu0 %130, %v73
  %v132 = vpop.permute.xlu0 %131
  %135 = vset.pattern.permute.xlu0 0
  %136 = vperm.xlu0 %135, %v74
  %v137 = vpop.permute.xlu0 %136
  %140 = vset.pattern.permute.xlu0 0
  %141 = vperm.xlu0 %140, %v75
  %v142 = vpop.permute.xlu0 %141
  %145 = vset.pattern.permute.xlu0 0
  %146 = vperm.xlu0 %145, %v76
  %v147 = vpop.permute.xlu0 %146
  %150 = vset.pattern.permute.xlu0 0
  %151 = vperm.xlu0 %150, %v77
  %v152 = vpop.permute.xlu0 %151
  %155 = vset.pattern.permute.xlu0 0
  %156 = vperm.xlu0 %155, %v78
  %v157 = vpop.permute.xlu0 %156
  %160 = vset.pattern.permute.xlu0 0
  %161 = vperm.xlu0 %160, %v79
  %v162 = vpop.permute.xlu0 %161
  %165 = vset.pattern.permute.xlu0 0
  %166 = vperm.xlu0 %165, %v80
  %v167 = vpop.permute.xlu0 %166
  %170 = vset.pattern.permute.xlu0 0
  %171 = vperm.xlu0 %170, %v81
  %v172 = vpop.permute.xlu0 %171
  %175 = vset.pattern.permute.xlu0 0
  %176 = vperm.xlu0 %175, %v82
  %v177 = vpop.permute.xlu0 %176
  %180 = vset.pattern.permute.xlu0 0
  %181 = vperm.xlu0 %180, %v83
  %v182 = vpop.permute.xlu0 %181
  %v184 = vmul.f32 %v87, %v15
  %v185 = vmul.f32 %v92, %v15
  %v186 = vmul.f32 %v97, %v15
  %v187 = vmul.f32 %v102, %v15
  %v188 = vmul.f32 %v107, %v15
  %v189 = vmul.f32 %v112, %v15
  %v190 = vmul.f32 %v117, %v15
  %v191 = vmul.f32 %v122, %v15
  %v192 = vmul.f32 %v127, %v15
  %v193 = vmul.f32 %v132, %v15
  %v194 = vmul.f32 %v137, %v15
  %v195 = vmul.f32 %v142, %v15
  %v196 = vmul.f32 %v147, %v15
  %v197 = vmul.f32 %v152, %v15
  %v198 = vmul.f32 %v157, %v15
  %v199 = vmul.f32 %v162, %v15
  %v200 = vmul.f32 %v167, %v15
  %v201 = vmul.f32 %v172, %v15
  %v202 = vmul.f32 %v177, %v15
  %v203 = vmul.f32 %v182, %v15
  %v204 = vadd.f32 %v184, %v16
  %v205 = vadd.f32 %v185, %v16
  %v206 = vadd.f32 %v186, %v16
  %v207 = vadd.f32 %v187, %v16
  %v208 = vadd.f32 %v188, %v16
  %v209 = vadd.f32 %v189, %v16
  %v210 = vadd.f32 %v190, %v16
  %v211 = vadd.f32 %v191, %v16
  %v212 = vadd.f32 %v192, %v16
  %v213 = vadd.f32 %v193, %v16
  %v214 = vadd.f32 %v194, %v16
  %v215 = vadd.f32 %v195, %v16
  %v216 = vadd.f32 %v196, %v16
  %v217 = vadd.f32 %v197, %v16
  %v218 = vadd.f32 %v198, %v16
  %v219 = vadd.f32 %v199, %v16
  %v220 = vadd.f32 %v200, %v16
  %v221 = vadd.f32 %v201, %v16
  %v222 = vadd.f32 %v202, %v16
  %v223 = vadd.f32 %v203, %v16
  %v224 = vmax.f32 %v204, %v214
  %v225 = vmax.f32 %v205, %v215
  %v226 = vmax.f32 %v206, %v216
  %v227 = vmax.f32 %v207, %v217
  %v228 = vmax.f32 %v208, %v218
  %v229 = vmax.f32 %v209, %v219
  %v230 = vmax.f32 %v210, %v220
  %v231 = vmax.f32 %v211, %v221
  %v232 = vmax.f32 %v212, %v222
  %v233 = vmax.f32 %v213, %v223
  %v234 = vmax.f32 %v224, 0.0
  %v235 = vmax.f32 %v225, 0.0
  %v236 = vmax.f32 %v226, 0.0
  %v237 = vmax.f32 %v227, 0.0
  %v238 = vmax.f32 %v228, 0.0
  %v239 = vmax.f32 %v229, 0.0
  %v240 = vmax.f32 %v230, 0.0
  %v241 = vmax.f32 %v231, 0.0
  %v242 = vmax.f32 %v232, 0.0
  %v243 = vmax.f32 %v233, 0.0
  %v244 = vpack.c.bf16 %v235, %v234
  %v245 = vpack.c.bf16 %v237, %v236
  %v246 = vpack.c.bf16 %v239, %v238
  %v247 = vpack.c.bf16 %v241, %v240
  %v248 = vpack.c.bf16 %v243, %v242
  %v253 = vunpack.c.l.b16 %v24
  %v254 = vunpack.c.l.b16 %v25
  %v255 = vunpack.c.l.b16 %v26
  %v256 = vunpack.c.l.b16 %v27
  %v257 = vpack.c.b16 %v254, %v253
  %v258 = vpack.c.b16 %v256, %v255
  %vm261 = vcmask 261120
  %v263 = vsel %vm261, %v244, 0
  %v266 = vsel %vm261, %v245, 0
  %v269 = vsel %vm261, %v246, 0
  %v272 = vsel %vm261, %v247, 0
  %v275 = vsel %vm261, %v248, 0
  %277 = vmatpush.bf16.msra.mxu0 0
  %278 = vmatpush.bf16.msra.mxu0 0
  %279 = vmatpush.bf16.msra.mxu0 0
  %280 = vmatpush.bf16.msra.mxu0 0
  %281 = vmatpush.bf16.msra.mxu0 0
  %282 = vmatpush.bf16.msra.mxu0 0
  %283 = vmatpush.bf16.msra.mxu0 %v258
  %284 = vmatpush.bf16.msra.mxu0 %v257
  %285 = vmatmul.bf16.gmra.mxu0 %v263
  %v286 = vpop.f32.mrf.mxu0
  %v287 = vadd.f32 %v17, %v286
  %v288 = vpop.f32.mrf.mxu0
  %v289 = vadd.f32 %v17, %v288
  %290 = vmatmul.bf16.gmra.mxu0 %v266
  %v291 = vpop.f32.mrf.mxu0
  %v292 = vadd.f32 %v17, %v291
  %v293 = vpop.f32.mrf.mxu0
  %v294 = vadd.f32 %v17, %v293
  %295 = vmatmul.bf16.gmra.mxu0 %v269
  %v296 = vpop.f32.mrf.mxu0
  %v297 = vadd.f32 %v17, %v296
  %v298 = vpop.f32.mrf.mxu0
  %v299 = vadd.f32 %v17, %v298
  %300 = vmatmul.bf16.gmra.mxu0 %v272
  %v301 = vpop.f32.mrf.mxu0
  %v302 = vadd.f32 %v17, %v301
  %v303 = vpop.f32.mrf.mxu0
  %v304 = vadd.f32 %v17, %v303
  %305 = vmatmul.bf16.gmra.mxu0 %v275
  %v306 = vpop.f32.mrf.mxu0
  %v307 = vadd.f32 %v17, %v306
  %v308 = vpop.f32.mrf.mxu0
  %v309 = vadd.f32 %v17, %v308
  %310 = vdwg.mxu0
  %v311 = vmax.f32 %v287, %v299
  %v312 = vmax.f32 %v289, %v302
  %v313 = vmax.f32 %v292, %v304
  %v314 = vmax.f32 %v294, %v307
  %v315 = vmax.f32 %v297, %v309
  %v316 = vmax.f32 %v311, 0.0
  %v317 = vmax.f32 %v312, 0.0
  %v318 = vmax.f32 %v313, 0.0
  %v319 = vmax.f32 %v314, 0.0
  %v320 = vmax.f32 %v315, 0.0
  %322 = vrot.lane.b32.xlu0 %v317, 32
  %v323 = vpop.permute.xlu0 %322
  %326 = vrot.lane.b32.xlu0 %v318, 64
  %v327 = vpop.permute.xlu0 %326
  %330 = vrot.lane.b32.xlu0 %v319, 96
  %v331 = vpop.permute.xlu0 %330
  %v333 = vsel %vm261, %v316, %v323
  %vm334 = vcmask 523264
  %v335 = vsel %vm334, %v333, %v327
  %vm336 = vcmask 785408
  %v337 = vsel %vm336, %v335, %v331
  %v338 = vpack.c.bf16 %v337, %v337
  %v339 = vpack.c.bf16 %v320, %v320
  %v341 = vperm.slane %v19, 0
  %v342 = vperm.slane %v19, 1
  %v365 = vunpack.c.l.b16 %v36
  %v366 = vunpack.c.h.b16 %v36
  %v367 = vunpack.c.l.b16 %v37
  %v368 = vunpack.c.h.b16 %v37
  %v369 = vunpack.c.l.b16 %v38
  %v370 = vunpack.c.h.b16 %v38
  %v371 = vunpack.c.l.b16 %v39
  %v372 = vunpack.c.h.b16 %v39
  %v373 = vunpack.c.l.b16 %v40
  %v374 = vunpack.c.h.b16 %v40
  %v375 = vunpack.c.l.b16 %v41
  %v376 = vunpack.c.h.b16 %v41
  %v377 = vunpack.c.l.b16 %v42
  %v378 = vunpack.c.h.b16 %v42
  %v379 = vunpack.c.l.b16 %v43
  %v380 = vunpack.c.h.b16 %v43
  %v381 = vunpack.c.l.b16 %v44
  %v382 = vunpack.c.h.b16 %v44
  %v383 = vunpack.c.l.b16 %v45
  %v384 = vunpack.c.h.b16 %v45
  %v385 = vunpack.c.l.b16 %v46
  %v386 = vunpack.c.h.b16 %v46
  %v387 = vunpack.c.l.b16 %v47
  %v388 = vunpack.c.h.b16 %v47
  %v389 = vunpack.c.l.b16 %v48
  %v390 = vunpack.c.h.b16 %v48
  %v391 = vunpack.c.l.b16 %v49
  %v392 = vunpack.c.h.b16 %v49
  %v393 = vunpack.c.l.b16 %v50
  %v394 = vunpack.c.h.b16 %v50
  %v395 = vunpack.c.l.b16 %v51
  %v396 = vunpack.c.h.b16 %v51
  %v397 = vunpack.c.l.b16 %v52
  %v398 = vunpack.c.h.b16 %v52
  %v399 = vunpack.c.l.b16 %v53
  %v400 = vunpack.c.h.b16 %v53
  %v401 = vunpack.c.l.b16 %v54
  %v402 = vunpack.c.h.b16 %v54
  %v403 = vunpack.c.l.b16 %v55
  %v404 = vunpack.c.h.b16 %v55
  %v405 = vpack.c.b16 %v367, %v365
  %v406 = vpack.c.b16 %v368, %v366
  %v407 = vpack.c.b16 %v371, %v369
  %v408 = vpack.c.b16 %v372, %v370
  %v409 = vpack.c.b16 %v375, %v373
  %v410 = vpack.c.b16 %v376, %v374
  %v411 = vpack.c.b16 %v379, %v377
  %v412 = vpack.c.b16 %v380, %v378
  %v413 = vpack.c.b16 %v383, %v381
  %v414 = vpack.c.b16 %v384, %v382
  %v415 = vpack.c.b16 %v387, %v385
  %v416 = vpack.c.b16 %v388, %v386
  %v417 = vpack.c.b16 %v391, %v389
  %v418 = vpack.c.b16 %v392, %v390
  %v419 = vpack.c.b16 %v395, %v393
  %v420 = vpack.c.b16 %v396, %v394
  %v421 = vpack.c.b16 %v399, %v397
  %v422 = vpack.c.b16 %v400, %v398
  %v423 = vpack.c.b16 %v403, %v401
  %v424 = vpack.c.b16 %v404, %v402
  %v446 = vsel %vm261, %v339, 0
  %448 = vmatpush.bf16.msra.mxu0 %v419
  %449 = vmatpush.bf16.msra.mxu0 %v417
  %450 = vmatpush.bf16.msra.mxu0 %v415
  %451 = vmatpush.bf16.msra.mxu0 %v413
  %452 = vmatpush.bf16.msra.mxu0 %v411
  %453 = vmatpush.bf16.msra.mxu0 %v409
  %454 = vmatpush.bf16.msra.mxu0 %v407
  %455 = vmatpush.bf16.msra.mxu0 %v405
  %456 = vmatmul.bf16.gmra.mxu0 %v338
  %v457 = vpop.f32.mrf.mxu0
  %v458 = vadd.f32 %v341, %v457
  %v459 = vpop.f32.mrf.mxu0
  %460 = vdwg.mxu0
  %461 = vmatpush.bf16.msra.mxu0 0
  %462 = vmatpush.bf16.msra.mxu0 0
  %463 = vmatpush.bf16.msra.mxu0 0
  %464 = vmatpush.bf16.msra.mxu0 0
  %465 = vmatpush.bf16.msra.mxu0 0
  %466 = vmatpush.bf16.msra.mxu0 0
  %467 = vmatpush.bf16.msra.mxu0 %v423
  %468 = vmatpush.bf16.msra.mxu0 %v421
  %469 = vmatmul.bf16.gmra.mxu0 %v446
  %v470 = vpop.f32.mrf.mxu0
  %v471 = vadd.f32 %v458, %v470
  %v472 = vpop.f32.mrf.mxu0
  %473 = vdwg.mxu0
  %474 = vmatpush.bf16.msra.mxu0 %v420
  %475 = vmatpush.bf16.msra.mxu0 %v418
  %476 = vmatpush.bf16.msra.mxu0 %v416
  %477 = vmatpush.bf16.msra.mxu0 %v414
  %478 = vmatpush.bf16.msra.mxu0 %v412
  %479 = vmatpush.bf16.msra.mxu0 %v410
  %480 = vmatpush.bf16.msra.mxu0 %v408
  %481 = vmatpush.bf16.msra.mxu0 %v406
  %482 = vmatmul.bf16.gmra.mxu0 %v338
  %v483 = vpop.f32.mrf.mxu0
  %v484 = vadd.f32 %v342, %v483
  %v485 = vpop.f32.mrf.mxu0
  %486 = vdwg.mxu0
  %487 = vmatpush.bf16.msra.mxu0 0
  %488 = vmatpush.bf16.msra.mxu0 0
  %489 = vmatpush.bf16.msra.mxu0 0
  %490 = vmatpush.bf16.msra.mxu0 0
  %491 = vmatpush.bf16.msra.mxu0 0
  %492 = vmatpush.bf16.msra.mxu0 0
  %493 = vmatpush.bf16.msra.mxu0 %v424
  %494 = vmatpush.bf16.msra.mxu0 %v422
  %495 = vmatmul.bf16.gmra.mxu0 %v446
  %v496 = vpop.f32.mrf.mxu0
  %v497 = vadd.f32 %v484, %v496
  %v498 = vpop.f32.mrf.mxu0
  %499 = vdwg.mxu0
  %502 = vst [vmem:[#allocation1] sm:$0xff] %v471
  %503 = vst [vmem:[#allocation1 + $0x9] sm:$0xff] %v497
  %s504 = scalar_lea.vmem [#allocation1], 7
  %v505 = vld [vmem:[%s504] ss:$9 sm:$0xff]
  %v507 = vrot.slane %v497, 7
  %vm508 = vcmask 1040384
  %v509 = vsel %vm508, %v471, %v507
  %v511 = vsel %vm23, %v505, %v509
  %v520 = vunpack.c.l.b16 %v28
  %v521 = vunpack.c.h.b16 %v28
  %v522 = vunpack.c.l.b16 %v29
  %v523 = vunpack.c.h.b16 %v29
  %v524 = vunpack.c.l.b16 %v30
  %v525 = vunpack.c.h.b16 %v30
  %v526 = vunpack.c.l.b16 %v31
  %v527 = vunpack.c.h.b16 %v31
  %v528 = vunpack.c.l.b16 %v32
  %v529 = vunpack.c.h.b16 %v32
  %v530 = vunpack.c.l.b16 %v33
  %v531 = vunpack.c.h.b16 %v33
  %v532 = vunpack.c.l.b16 %v34
  %v533 = vunpack.c.h.b16 %v34
  %v534 = vunpack.c.l.b16 %v35
  %v535 = vunpack.c.h.b16 %v35
  %v536 = vpack.c.b16 %v522, %v520
  %v537 = vpack.c.b16 %v523, %v521
  %v538 = vpack.c.b16 %v526, %v524
  %v539 = vpack.c.b16 %v527, %v525
  %v540 = vpack.c.b16 %v530, %v528
  %v541 = vpack.c.b16 %v531, %v529
  %v542 = vpack.c.b16 %v534, %v532
  %v543 = vpack.c.b16 %v535, %v533
  %v553 = vsel %vm334, 0, 0
  %555 = vmatpush.bf16.msra.mxu0 0
  %556 = vmatpush.bf16.msra.mxu0 0
  %557 = vmatpush.bf16.msra.mxu0 0
  %558 = vmatpush.bf16.msra.mxu0 0
  %559 = vmatpush.bf16.msra.mxu0 %v542
  %560 = vmatpush.bf16.msra.mxu0 %v540
  %561 = vmatpush.bf16.msra.mxu0 %v538
  %562 = vmatpush.bf16.msra.mxu0 %v536
  %563 = vmatmul.bf16.gmra.mxu0 %v553
  %v564 = vpop.f32.mrf.mxu0
  %v565 = vadd.f32 0.0, %v564
  %v566 = vpop.f32.mrf.mxu0
  %567 = vdwg.mxu0
  %568 = vmatpush.bf16.msra.mxu0 0
  %569 = vmatpush.bf16.msra.mxu0 0
  %570 = vmatpush.bf16.msra.mxu0 0
  %571 = vmatpush.bf16.msra.mxu0 0
  %572 = vmatpush.bf16.msra.mxu0 %v543
  %573 = vmatpush.bf16.msra.mxu0 %v541
  %574 = vmatpush.bf16.msra.mxu0 %v539
  %575 = vmatpush.bf16.msra.mxu0 %v537
  %576 = vmatmul.bf16.gmra.mxu0 %v553
  %v577 = vpop.f32.mrf.mxu0
  %v578 = vadd.f32 0.0, %v577
  %v579 = vpop.f32.mrf.mxu0
  %580 = vdwg.mxu0
  %v583 = vrot.slane %v578, 7
  %v584 = vsel %vm508, %v565, %v583
  %v586 = vadd.f32 %v511, %v584
  %v587 = vxor.u32 %v586, 2147483648
  %v588 = vmul.f32 %v587, 1.442695
  %v589 = vpow.pop %v588
  %v590 = vadd.f32 %v589, 1.0
  %v591 = vrcp.pop %v590
  %v592 = vmul.f32 %v590, %v591
  %v593 = vsub.f32 1.0, %v592
  %v594 = vmul.f32 %v591, %v593
  %v595 = vadd.f32 %v591, %v594
  %vm596 = vweird.f32 %v590
  %vm597 = vweird.f32 %v591
  %vm598 = vmor %vm596, %vm597
  %v599 = vsel %vm598, %v591, %v595
  %v600 = vand.u32 2147483647, %v590
  %vm601 = vcmp.eq.f32.partialorder %v600, 8.507059e+37
  %v602 = vand.u32 %v590, 2147483648
  %v603 = vor.u32 1.1754944e-38, %v602
  %v604 = vsel %vm601, %v603, %v599
  %v605 = vmul.f32 1.0, %v604
  %v606 = vtanh.pop %v586
  %v607 = vmul.f32 %v605, 0.0
  %v609 = vrot.slane %v606, 1
  %v611 = vmul.f32 %v605, %v609
  %613 = vrot.lane.b32.xlu0 %v611, 64
  %v614 = vpop.permute.xlu0 %613
  %v616 = vadd.f32 %v607, %v614
  %v617 = vtanh.pop %v616
  %619 = vrot.lane.b32.xlu0 %v605, 64
  %v620 = vpop.permute.xlu0 %619
  %v621 = vrot.slane %v620, 1
  %624 = vrot.lane.b32.xlu0 %v617, 64
  %v625 = vpop.permute.xlu0 %624
  %v627 = vmul.f32 %v621, %v625
  %628 = vst [vmem:[#allocation1] sm:$0xff] %v471
  %629 = vst [vmem:[#allocation1 + $0x9] sm:$0xff] %v497
  %s630 = scalar_lea.vmem [#allocation1], 6
  %v631 = vld [vmem:[%s630] ss:$9 sm:$0xff]
  %633 = vst [vmem:[#allocation1] sm:$0xff] %v471
  %634 = vst [vmem:[#allocation1 + $0x9] sm:$0xff] %v497
  %s635 = scalar_lea.vmem [#allocation1], 1
  %v636 = vld [vmem:[%s635] ss:$9 sm:$0xff]
  %v638 = vsel %vm23, %v631, %v636
  %v639 = vpack.c.bf16 %v627, %v627
  %v641 = vsel %vm334, %v639, 0
  %643 = vmatpush.bf16.msra.mxu0 0
  %644 = vmatpush.bf16.msra.mxu0 0
  %645 = vmatpush.bf16.msra.mxu0 0
  %646 = vmatpush.bf16.msra.mxu0 0
  %647 = vmatpush.bf16.msra.mxu0 %v542
  %648 = vmatpush.bf16.msra.mxu0 %v540
  %649 = vmatpush.bf16.msra.mxu0 %v538
  %650 = vmatpush.bf16.msra.mxu0 %v536
  %651 = vmatmul.bf16.gmra.mxu0 %v641
  %v652 = vpop.f32.mrf.mxu0
  %v653 = vadd.f32 0.0, %v652
  %v654 = vpop.f32.mrf.mxu0
  %655 = vdwg.mxu0
  %656 = vmatpush.bf16.msra.mxu0 0
  %657 = vmatpush.bf16.msra.mxu0 0
  %658 = vmatpush.bf16.msra.mxu0 0
  %659 = vmatpush.bf16.msra.mxu0 0
  %660 = vmatpush.bf16.msra.mxu0 %v543
  %661 = vmatpush.bf16.msra.mxu0 %v541
  %662 = vmatpush.bf16.msra.mxu0 %v539
  %663 = vmatpush.bf16.msra.mxu0 %v537
  %664 = vmatmul.bf16.gmra.mxu0 %v641
  %v665 = vpop.f32.mrf.mxu0
  %v666 = vadd.f32 0.0, %v665
  %v667 = vpop.f32.mrf.mxu0
  %668 = vdwg.mxu0
  %v671 = vrot.slane %v666, 7
  %v672 = vsel %vm508, %v653, %v671
  %v674 = vadd.f32 %v638, %v672
  %v675 = vxor.u32 %v674, 2147483648
  %v676 = vmul.f32 %v675, 1.442695
  %v677 = vpow.pop %v676
  %v678 = vadd.f32 %v677, 1.0
  %v679 = vrcp.pop %v678
  %v680 = vmul.f32 %v678, %v679
  %v681 = vsub.f32 1.0, %v680
  %v682 = vmul.f32 %v679, %v681
  %v683 = vadd.f32 %v679, %v682
  %vm684 = vweird.f32 %v678
  %vm685 = vweird.f32 %v679
  %vm686 = vmor %vm684, %vm685
  %v687 = vsel %vm686, %v679, %v683
  %v688 = vand.u32 2147483647, %v678
  %vm689 = vcmp.eq.f32.partialorder %v688, 8.507059e+37
  %v690 = vand.u32 %v678, 2147483648
  %v691 = vor.u32 1.1754944e-38, %v690
  %v692 = vsel %vm689, %v691, %v687
  %v693 = vmul.f32 1.0, %v692
  %v694 = vtanh.pop %v674
  %v695 = vmul.f32 %v693, %v616
  %v697 = vrot.slane %v694, 1
  %v699 = vmul.f32 %v693, %v697
  %701 = vrot.lane.b32.xlu0 %v699, 64
  %v702 = vpop.permute.xlu0 %701
  %v704 = vadd.f32 %v695, %v702
  %v705 = vtanh.pop %v704
  %707 = vrot.lane.b32.xlu0 %v693, 64
  %v708 = vpop.permute.xlu0 %707
  %v709 = vrot.slane %v708, 1
  %712 = vrot.lane.b32.xlu0 %v705, 64
  %v713 = vpop.permute.xlu0 %712
  %v715 = vmul.f32 %v709, %v713
  %716 = vst [vmem:[#allocation1] sm:$0xff] %v471
  %717 = vst [vmem:[#allocation1 + $0x9] sm:$0xff] %v497
  %s718 = scalar_lea.vmem [#allocation1], 5
  %v719 = vld [vmem:[%s718] ss:$9 sm:$0xff]
  %721 = vst [vmem:[#allocation1] sm:$0xff] %v471
  %722 = vst [vmem:[#allocation1 + $0x9] sm:$0xff] %v497
  %s723 = scalar_lea.vmem [#allocation1], 2
  %v724 = vld [vmem:[%s723] ss:$9 sm:$0xff]
  %v726 = vsel %vm23, %v719, %v724
  %v727 = vpack.c.bf16 %v715, %v715
  %v729 = vsel %vm334, %v727, 0
  %731 = vmatpush.bf16.msra.mxu0 0
  %732 = vmatpush.bf16.msra.mxu0 0
  %733 = vmatpush.bf16.msra.mxu0 0
  %734 = vmatpush.bf16.msra.mxu0 0
  %735 = vmatpush.bf16.msra.mxu0 %v542
  %736 = vmatpush.bf16.msra.mxu0 %v540
  %737 = vmatpush.bf16.msra.mxu0 %v538
  %738 = vmatpush.bf16.msra.mxu0 %v536
  %739 = vmatmul.bf16.gmra.mxu0 %v729
  %v740 = vpop.f32.mrf.mxu0
  %v741 = vadd.f32 0.0, %v740
  %v742 = vpop.f32.mrf.mxu0
  %743 = vdwg.mxu0
  %744 = vmatpush.bf16.msra.mxu0 0
  %745 = vmatpush.bf16.msra.mxu0 0
  %746 = vmatpush.bf16.msra.mxu0 0
  %747 = vmatpush.bf16.msra.mxu0 0
  %748 = vmatpush.bf16.msra.mxu0 %v543
  %749 = vmatpush.bf16.msra.mxu0 %v541
  %750 = vmatpush.bf16.msra.mxu0 %v539
  %751 = vmatpush.bf16.msra.mxu0 %v537
  %752 = vmatmul.bf16.gmra.mxu0 %v729
  %v753 = vpop.f32.mrf.mxu0
  %v754 = vadd.f32 0.0, %v753
  %v755 = vpop.f32.mrf.mxu0
  %756 = vdwg.mxu0
  %v759 = vrot.slane %v754, 7
  %v760 = vsel %vm508, %v741, %v759
  %v762 = vadd.f32 %v726, %v760
  %v763 = vxor.u32 %v762, 2147483648
  %v764 = vmul.f32 %v763, 1.442695
  %v765 = vpow.pop %v764
  %v766 = vadd.f32 %v765, 1.0
  %v767 = vrcp.pop %v766
  %v768 = vmul.f32 %v766, %v767
  %v769 = vsub.f32 1.0, %v768
  %v770 = vmul.f32 %v767, %v769
  %v771 = vadd.f32 %v767, %v770
  %vm772 = vweird.f32 %v766
  %vm773 = vweird.f32 %v767
  %vm774 = vmor %vm772, %vm773
  %v775 = vsel %vm774, %v767, %v771
  %v776 = vand.u32 2147483647, %v766
  %vm777 = vcmp.eq.f32.partialorder %v776, 8.507059e+37
  %v778 = vand.u32 %v766, 2147483648
  %v779 = vor.u32 1.1754944e-38, %v778
  %v780 = vsel %vm777, %v779, %v775
  %v781 = vmul.f32 1.0, %v780
  %v782 = vtanh.pop %v762
  %v783 = vmul.f32 %v781, %v704
  %v785 = vrot.slane %v782, 1
  %v787 = vmul.f32 %v781, %v785
  %789 = vrot.lane.b32.xlu0 %v787, 64
  %v790 = vpop.permute.xlu0 %789
  %v792 = vadd.f32 %v783, %v790
  %v793 = vtanh.pop %v792
  %795 = vrot.lane.b32.xlu0 %v781, 64
  %v796 = vpop.permute.xlu0 %795
  %v797 = vrot.slane %v796, 1
  %800 = vrot.lane.b32.xlu0 %v793, 64
  %v801 = vpop.permute.xlu0 %800
  %v803 = vmul.f32 %v797, %v801
  %804 = vst [vmem:[#allocation1] sm:$0xff] %v471
  %805 = vst [vmem:[#allocation1 + $0x9] sm:$0xff] %v497
  %s806 = scalar_lea.vmem [#allocation1], 4
  %v807 = vld [vmem:[%s806] ss:$9 sm:$0xff]
  %809 = vst [vmem:[#allocation1] sm:$0xff] %v471
  %810 = vst [vmem:[#allocation1 + $0x9] sm:$0xff] %v497
  %s811 = scalar_lea.vmem [#allocation1], 3
  %v812 = vld [vmem:[%s811] ss:$9 sm:$0xff]
  %v814 = vsel %vm23, %v807, %v812
  %v815 = vpack.c.bf16 %v803, %v803
  %v817 = vsel %vm334, %v815, 0
  %819 = vmatpush.bf16.msra.mxu0 0
  %820 = vmatpush.bf16.msra.mxu0 0
  %821 = vmatpush.bf16.msra.mxu0 0
  %822 = vmatpush.bf16.msra.mxu0 0
  %823 = vmatpush.bf16.msra.mxu0 %v542
  %824 = vmatpush.bf16.msra.mxu0 %v540
  %825 = vmatpush.bf16.msra.mxu0 %v538
  %826 = vmatpush.bf16.msra.mxu0 %v536
  %827 = vmatmul.bf16.gmra.mxu0 %v817
  %v828 = vpop.f32.mrf.mxu0
  %v829 = vadd.f32 0.0, %v828
  %v830 = vpop.f32.mrf.mxu0
  %831 = vdwg.mxu0
  %832 = vmatpush.bf16.msra.mxu0 0
  %833 = vmatpush.bf16.msra.mxu0 0
  %834 = vmatpush.bf16.msra.mxu0 0
  %835 = vmatpush.bf16.msra.mxu0 0
  %836 = vmatpush.bf16.msra.mxu0 %v543
  %837 = vmatpush.bf16.msra.mxu0 %v541
  %838 = vmatpush.bf16.msra.mxu0 %v539
  %839 = vmatpush.bf16.msra.mxu0 %v537
  %840 = vmatmul.bf16.gmra.mxu0 %v817
  %v841 = vpop.f32.mrf.mxu0
  %v842 = vadd.f32 0.0, %v841
  %v843 = vpop.f32.mrf.mxu0
  %844 = vdwg.mxu0
  %v847 = vrot.slane %v842, 7
  %v848 = vsel %vm508, %v829, %v847
  %v850 = vadd.f32 %v814, %v848
  %v851 = vxor.u32 %v850, 2147483648
  %v852 = vmul.f32 %v851, 1.442695
  %v853 = vpow.pop %v852
  %v854 = vadd.f32 %v853, 1.0
  %v855 = vrcp.pop %v854
  %v856 = vmul.f32 %v854, %v855
  %v857 = vsub.f32 1.0, %v856
  %v858 = vmul.f32 %v855, %v857
  %v859 = vadd.f32 %v855, %v858
  %vm860 = vweird.f32 %v854
  %vm861 = vweird.f32 %v855
  %vm862 = vmor %vm860, %vm861
  %v863 = vsel %vm862, %v855, %v859
  %v864 = vand.u32 2147483647, %v854
  %vm865 = vcmp.eq.f32.partialorder %v864, 8.507059e+37
  %v866 = vand.u32 %v854, 2147483648
  %v867 = vor.u32 1.1754944e-38, %v866
  %v868 = vsel %vm865, %v867, %v863
  %v869 = vmul.f32 1.0, %v868
  %v870 = vtanh.pop %v850
  %v871 = vmul.f32 %v869, %v792
  %v873 = vrot.slane %v870, 1
  %v875 = vmul.f32 %v869, %v873
  %877 = vrot.lane.b32.xlu0 %v875, 64
  %v878 = vpop.permute.xlu0 %877
  %v880 = vadd.f32 %v871, %v878
  %v881 = vtanh.pop %v880
  %883 = vrot.lane.b32.xlu0 %v869, 64
  %v884 = vpop.permute.xlu0 %883
  %v885 = vrot.slane %v884, 1
  %888 = vrot.lane.b32.xlu0 %v881, 64
  %v889 = vpop.permute.xlu0 %888
  %v891 = vmul.f32 %v885, %v889
  %892 = vst [vmem:[#allocation1] sm:$0xff] %v471
  %893 = vst [vmem:[#allocation1 + $0x9] sm:$0xff] %v497
  %s894 = scalar_lea.vmem [#allocation1], 3
  %v895 = vld [vmem:[%s894] ss:$9 sm:$0xff]
  %897 = vst [vmem:[#allocation1] sm:$0xff] %v471
  %898 = vst [vmem:[#allocation1 + $0x9] sm:$0xff] %v497
  %s899 = scalar_lea.vmem [#allocation1], 4
  %v900 = vld [vmem:[%s899] ss:$9 sm:$0xff]
  %v902 = vsel %vm23, %v895, %v900
  %v903 = vpack.c.bf16 %v891, %v891
  %v905 = vsel %vm334, %v903, 0
  %907 = vmatpush.bf16.msra.mxu0 0
  %908 = vmatpush.bf16.msra.mxu0 0
  %909 = vmatpush.bf16.msra.mxu0 0
  %910 = vmatpush.bf16.msra.mxu0 0
  %911 = vmatpush.bf16.msra.mxu0 %v542
  %912 = vmatpush.bf16.msra.mxu0 %v540
  %913 = vmatpush.bf16.msra.mxu0 %v538
  %914 = vmatpush.bf16.msra.mxu0 %v536
  %915 = vmatmul.bf16.gmra.mxu0 %v905
  %v916 = vpop.f32.mrf.mxu0
  %v917 = vadd.f32 0.0, %v916
  %v918 = vpop.f32.mrf.mxu0
  %919 = vdwg.mxu0
  %920 = vmatpush.bf16.msra.mxu0 0
  %921 = vmatpush.bf16.msra.mxu0 0
  %922 = vmatpush.bf16.msra.mxu0 0
  %923 = vmatpush.bf16.msra.mxu0 0
  %924 = vmatpush.bf16.msra.mxu0 %v543
  %925 = vmatpush.bf16.msra.mxu0 %v541
  %926 = vmatpush.bf16.msra.mxu0 %v539
  %927 = vmatpush.bf16.msra.mxu0 %v537
  %928 = vmatmul.bf16.gmra.mxu0 %v905
  %v929 = vpop.f32.mrf.mxu0
  %v930 = vadd.f32 0.0, %v929
  %v931 = vpop.f32.mrf.mxu0
  %932 = vdwg.mxu0
  %v935 = vrot.slane %v930, 7
  %v936 = vsel %vm508, %v917, %v935
  %v938 = vadd.f32 %v902, %v936
  %v939 = vxor.u32 %v938, 2147483648
  %v940 = vmul.f32 %v939, 1.442695
  %v941 = vpow.pop %v940
  %v942 = vadd.f32 %v941, 1.0
  %v943 = vrcp.pop %v942
  %v944 = vmul.f32 %v942, %v943
  %v945 = vsub.f32 1.0, %v944
  %v946 = vmul.f32 %v943, %v945
  %v947 = vadd.f32 %v943, %v946
  %vm948 = vweird.f32 %v942
  %vm949 = vweird.f32 %v943
  %vm950 = vmor %vm948, %vm949
  %v951 = vsel %vm950, %v943, %v947
  %v952 = vand.u32 2147483647, %v942
  %vm953 = vcmp.eq.f32.partialorder %v952, 8.507059e+37
  %v954 = vand.u32 %v942, 2147483648
  %v955 = vor.u32 1.1754944e-38, %v954
  %v956 = vsel %vm953, %v955, %v951
  %v957 = vmul.f32 1.0, %v956
  %v958 = vtanh.pop %v938
  %v959 = vmul.f32 %v957, %v880
  %v961 = vrot.slane %v958, 1
  %v963 = vmul.f32 %v957, %v961
  %965 = vrot.lane.b32.xlu0 %v963, 64
  %v966 = vpop.permute.xlu0 %965
  %v968 = vadd.f32 %v959, %v966
  %v969 = vtanh.pop %v968
  %971 = vrot.lane.b32.xlu0 %v957, 64
  %v972 = vpop.permute.xlu0 %971
  %v973 = vrot.slane %v972, 1
  %976 = vrot.lane.b32.xlu0 %v969, 64
  %v977 = vpop.permute.xlu0 %976
  %v979 = vmul.f32 %v973, %v977
  %980 = vst [vmem:[#allocation1] sm:$0xff] %v471
  %981 = vst [vmem:[#allocation1 + $0x9] sm:$0xff] %v497
  %s982 = scalar_lea.vmem [#allocation1], 2
  %v983 = vld [vmem:[%s982] ss:$9 sm:$0xff]
  %985 = vst [vmem:[#allocation1] sm:$0xff] %v471
  %986 = vst [vmem:[#allocation1 + $0x9] sm:$0xff] %v497
  %s987 = scalar_lea.vmem [#allocation1], 5
  %v988 = vld [vmem:[%s987] ss:$9 sm:$0xff]
  %v990 = vsel %vm23, %v983, %v988
  %v991 = vpack.c.bf16 %v979, %v979
  %v993 = vsel %vm334, %v991, 0
  %995 = vmatpush.bf16.msra.mxu0 0
  %996 = vmatpush.bf16.msra.mxu0 0
  %997 = vmatpush.bf16.msra.mxu0 0
  %998 = vmatpush.bf16.msra.mxu0 0
  %999 = vmatpush.bf16.msra.mxu0 %v542
  %1000 = vmatpush.bf16.msra.mxu0 %v540
  %1001 = vmatpush.bf16.msra.mxu0 %v538
  %1002 = vmatpush.bf16.msra.mxu0 %v536
  %1003 = vmatmul.bf16.gmra.mxu0 %v993
  %v1004 = vpop.f32.mrf.mxu0
  %v1005 = vadd.f32 0.0, %v1004
  %v1006 = vpop.f32.mrf.mxu0
  %1007 = vdwg.mxu0
  %1008 = vmatpush.bf16.msra.mxu0 0
  %1009 = vmatpush.bf16.msra.mxu0 0
  %1010 = vmatpush.bf16.msra.mxu0 0
  %1011 = vmatpush.bf16.msra.mxu0 0
  %1012 = vmatpush.bf16.msra.mxu0 %v543
  %1013 = vmatpush.bf16.msra.mxu0 %v541
  %1014 = vmatpush.bf16.msra.mxu0 %v539
  %1015 = vmatpush.bf16.msra.mxu0 %v537
  %1016 = vmatmul.bf16.gmra.mxu0 %v993
  %v1017 = vpop.f32.mrf.mxu0
  %v1018 = vadd.f32 0.0, %v1017
  %v1019 = vpop.f32.mrf.mxu0
  %1020 = vdwg.mxu0
  %v1023 = vrot.slane %v1018, 7
  %v1024 = vsel %vm508, %v1005, %v1023
  %v1026 = vadd.f32 %v990, %v1024
  %v1027 = vxor.u32 %v1026, 2147483648
  %v1028 = vmul.f32 %v1027, 1.442695
  %v1029 = vpow.pop %v1028
  %v1030 = vadd.f32 %v1029, 1.0
  %v1031 = vrcp.pop %v1030
  %v1032 = vmul.f32 %v1030, %v1031
  %v1033 = vsub.f32 1.0, %v1032
  %v1034 = vmul.f32 %v1031, %v1033
  %v1035 = vadd.f32 %v1031, %v1034
  %vm1036 = vweird.f32 %v1030
  %vm1037 = vweird.f32 %v1031
  %vm1038 = vmor %vm1036, %vm1037
  %v1039 = vsel %vm1038, %v1031, %v1035
  %v1040 = vand.u32 2147483647, %v1030
  %vm1041 = vcmp.eq.f32.partialorder %v1040, 8.507059e+37
  %v1042 = vand.u32 %v1030, 2147483648
  %v1043 = vor.u32 1.1754944e-38, %v1042
  %v1044 = vsel %vm1041, %v1043, %v1039
  %v1045 = vmul.f32 1.0, %v1044
  %v1046 = vtanh.pop %v1026
  %v1047 = vmul.f32 %v1045, %v968
  %v1049 = vrot.slane %v1046, 1
  %v1051 = vmul.f32 %v1045, %v1049
  %1053 = vrot.lane.b32.xlu0 %v1051, 64
  %v1054 = vpop.permute.xlu0 %1053
  %v1056 = vadd.f32 %v1047, %v1054
  %v1057 = vtanh.pop %v1056
  %1059 = vrot.lane.b32.xlu0 %v1045, 64
  %v1060 = vpop.permute.xlu0 %1059
  %v1061 = vrot.slane %v1060, 1
  %1064 = vrot.lane.b32.xlu0 %v1057, 64
  %v1065 = vpop.permute.xlu0 %1064
  %v1067 = vmul.f32 %v1061, %v1065
  %1068 = vst [vmem:[#allocation1] sm:$0xff] %v471
  %1069 = vst [vmem:[#allocation1 + $0x9] sm:$0xff] %v497
  %s1070 = scalar_lea.vmem [#allocation1], 1
  %v1071 = vld [vmem:[%s1070] ss:$9 sm:$0xff]
  %1073 = vst [vmem:[#allocation1] sm:$0xff] %v471
  %1074 = vst [vmem:[#allocation1 + $0x9] sm:$0xff] %v497
  %s1075 = scalar_lea.vmem [#allocation1], 6
  %v1076 = vld [vmem:[%s1075] ss:$9 sm:$0xff]
  %v1078 = vsel %vm23, %v1071, %v1076
  %v1079 = vpack.c.bf16 %v1067, %v1067
  %v1081 = vsel %vm334, %v1079, 0
  %1083 = vmatpush.bf16.msra.mxu0 0
  %1084 = vmatpush.bf16.msra.mxu0 0
  %1085 = vmatpush.bf16.msra.mxu0 0
  %1086 = vmatpush.bf16.msra.mxu0 0
  %1087 = vmatpush.bf16.msra.mxu0 %v542
  %1088 = vmatpush.bf16.msra.mxu0 %v540
  %1089 = vmatpush.bf16.msra.mxu0 %v538
  %1090 = vmatpush.bf16.msra.mxu0 %v536
  %1091 = vmatmul.bf16.gmra.mxu0 %v1081
  %v1092 = vpop.f32.mrf.mxu0
  %v1093 = vadd.f32 0.0, %v1092
  %v1094 = vpop.f32.mrf.mxu0
  %1095 = vdwg.mxu0
  %1096 = vmatpush.bf16.msra.mxu0 0
  %1097 = vmatpush.bf16.msra.mxu0 0
  %1098 = vmatpush.bf16.msra.mxu0 0
  %1099 = vmatpush.bf16.msra.mxu0 0
  %1100 = vmatpush.bf16.msra.mxu0 %v543
  %1101 = vmatpush.bf16.msra.mxu0 %v541
  %1102 = vmatpush.bf16.msra.mxu0 %v539
  %1103 = vmatpush.bf16.msra.mxu0 %v537
  %1104 = vmatmul.bf16.gmra.mxu0 %v1081
  %v1105 = vpop.f32.mrf.mxu0
  %v1106 = vadd.f32 0.0, %v1105
  %v1107 = vpop.f32.mrf.mxu0
  %1108 = vdwg.mxu0
  %v1111 = vrot.slane %v1106, 7
  %v1112 = vsel %vm508, %v1093, %v1111
  %v1114 = vadd.f32 %v1078, %v1112
  %v1115 = vxor.u32 %v1114, 2147483648
  %v1116 = vmul.f32 %v1115, 1.442695
  %v1117 = vpow.pop %v1116
  %v1118 = vadd.f32 %v1117, 1.0
  %v1119 = vrcp.pop %v1118
  %v1120 = vmul.f32 %v1118, %v1119
  %v1121 = vsub.f32 1.0, %v1120
  %v1122 = vmul.f32 %v1119, %v1121
  %v1123 = vadd.f32 %v1119, %v1122
  %vm1124 = vweird.f32 %v1118
  %vm1125 = vweird.f32 %v1119
  %vm1126 = vmor %vm1124, %vm1125
  %v1127 = vsel %vm1126, %v1119, %v1123
  %v1128 = vand.u32 2147483647, %v1118
  %vm1129 = vcmp.eq.f32.partialorder %v1128, 8.507059e+37
  %v1130 = vand.u32 %v1118, 2147483648
  %v1131 = vor.u32 1.1754944e-38, %v1130
  %v1132 = vsel %vm1129, %v1131, %v1127
  %v1133 = vmul.f32 1.0, %v1132
  %v1134 = vtanh.pop %v1114
  %v1135 = vmul.f32 %v1133, %v1056
  %v1137 = vrot.slane %v1134, 1
  %v1139 = vmul.f32 %v1133, %v1137
  %1141 = vrot.lane.b32.xlu0 %v1139, 64
  %v1142 = vpop.permute.xlu0 %1141
  %v1144 = vadd.f32 %v1135, %v1142
  %v1145 = vtanh.pop %v1144
  %1147 = vrot.lane.b32.xlu0 %v1133, 64
  %v1148 = vpop.permute.xlu0 %1147
  %v1149 = vrot.slane %v1148, 1
  %1152 = vrot.lane.b32.xlu0 %v1145, 64
  %v1153 = vpop.permute.xlu0 %1152
  %v1155 = vmul.f32 %v1149, %v1153
  %1156 = vst [vmem:[#allocation1] sm:$0xff] %v471
  %1157 = vst [vmem:[#allocation1 + $0x9] sm:$0xff] %v497
  %s1158 = scalar_lea.vmem [#allocation1], 7
  %v1159 = vld [vmem:[%s1158] ss:$9 sm:$0xff]
  %v1161 = vsel %vm23, %v509, %v1159
  %v1162 = vpack.c.bf16 %v1155, %v1155
  %v1164 = vsel %vm334, %v1162, 0
  %1166 = vmatpush.bf16.msra.mxu0 0
  %1167 = vmatpush.bf16.msra.mxu0 0
  %1168 = vmatpush.bf16.msra.mxu0 0
  %1169 = vmatpush.bf16.msra.mxu0 0
  %1170 = vmatpush.bf16.msra.mxu0 %v542
  %1171 = vmatpush.bf16.msra.mxu0 %v540
  %1172 = vmatpush.bf16.msra.mxu0 %v538
  %1173 = vmatpush.bf16.msra.mxu0 %v536
  %1174 = vmatmul.bf16.gmra.mxu0 %v1164
  %v1175 = vpop.f32.mrf.mxu0
  %v1176 = vadd.f32 0.0, %v1175
  %v1177 = vpop.f32.mrf.mxu0
  %1178 = vdwg.mxu0
  %1179 = vmatpush.bf16.msra.mxu0 0
  %1180 = vmatpush.bf16.msra.mxu0 0
  %1181 = vmatpush.bf16.msra.mxu0 0
  %1182 = vmatpush.bf16.msra.mxu0 0
  %1183 = vmatpush.bf16.msra.mxu0 %v543
  %1184 = vmatpush.bf16.msra.mxu0 %v541
  %1185 = vmatpush.bf16.msra.mxu0 %v539
  %1186 = vmatpush.bf16.msra.mxu0 %v537
  %1187 = vmatmul.bf16.gmra.mxu0 %v1164
  %v1188 = vpop.f32.mrf.mxu0
  %v1189 = vadd.f32 0.0, %v1188
  %v1190 = vpop.f32.mrf.mxu0
  %1191 = vdwg.mxu0
  %v1194 = vrot.slane %v1189, 7
  %v1195 = vsel %vm508, %v1176, %v1194
  %v1197 = vadd.f32 %v1161, %v1195
  %v1198 = vxor.u32 %v1197, 2147483648
  %v1199 = vmul.f32 %v1198, 1.442695
  %v1200 = vpow.pop %v1199
  %v1201 = vadd.f32 %v1200, 1.0
  %v1202 = vrcp.pop %v1201
  %v1203 = vmul.f32 %v1201, %v1202
  %v1204 = vsub.f32 1.0, %v1203
  %v1205 = vmul.f32 %v1202, %v1204
  %v1206 = vadd.f32 %v1202, %v1205
  %vm1207 = vweird.f32 %v1201
  %vm1208 = vweird.f32 %v1202
  %vm1209 = vmor %vm1207, %vm1208
  %v1210 = vsel %vm1209, %v1202, %v1206
  %v1211 = vand.u32 2147483647, %v1201
  %vm1212 = vcmp.eq.f32.partialorder %v1211, 8.507059e+37
  %v1213 = vand.u32 %v1201, 2147483648
  %v1214 = vor.u32 1.1754944e-38, %v1213
  %v1215 = vsel %vm1212, %v1214, %v1210
  %v1216 = vmul.f32 1.0, %v1215
  %v1217 = vtanh.pop %v1197
  %v1218 = vmul.f32 %v1216, %v1144
  %v1220 = vrot.slane %v1217, 1
  %v1222 = vmul.f32 %v1216, %v1220
  %1224 = vrot.lane.b32.xlu0 %v1222, 64
  %v1225 = vpop.permute.xlu0 %1224
  %v1227 = vadd.f32 %v1218, %v1225
  %v1228 = vtanh.pop %v1227
  %1230 = vrot.lane.b32.xlu0 %v1216, 64
  %v1231 = vpop.permute.xlu0 %1230
  %v1232 = vrot.slane %v1231, 1
  %1235 = vrot.lane.b32.xlu0 %v1228, 64
  %v1236 = vpop.permute.xlu0 %1235
  %v1238 = vmul.f32 %v1232, %v1236
  %v1240 = vperm.slane %v715, 0
  %v1243 = vperm.slane %v803, 0
  %v1246 = vperm.slane %v891, 0
  %v1249 = vperm.slane %v979, 0
  %v1252 = vperm.slane %v1067, 0
  %v1255 = vperm.slane %v1155, 0
  %v1258 = vperm.slane %v1238, 0
  %v1260 = vsel %vm508, %v627, %v1240
  %vm1261 = vcmask 1041408
  %v1262 = vsel %vm1261, %v1260, %v1243
  %vm1263 = vcmask 1042432
  %v1264 = vsel %vm1263, %v1262, %v1246
  %vm1265 = vcmask 1043456
  %v1266 = vsel %vm1265, %v1264, %v1249
  %vm1267 = vcmask 1044480
  %v1268 = vsel %vm1267, %v1266, %v1252
  %vm1269 = vcmask 1045504
  %v1270 = vsel %vm1269, %v1268, %v1255
  %vm1271 = vcmask 1046528
  %v1272 = vsel %vm1271, %v1270, %v1258
  %v1274 = vperm.slane %v627, 0
  %v1276 = vsel %vm508, %v1238, %v1255
  %v1277 = vsel %vm1261, %v1276, %v1252
  %v1278 = vsel %vm1263, %v1277, %v1249
  %v1279 = vsel %vm1265, %v1278, %v1246
  %v1280 = vsel %vm1267, %v1279, %v1243
  %v1281 = vsel %vm1269, %v1280, %v1240
  %v1282 = vsel %vm1271, %v1281, %v1274
  %v1283 = vsel %vm261, %v1272, %v1282
  %v1284 = vmax.f32 %v1283, 0.0
  %v1285 = vpack.c.bf16 %v1284, %v1284
  %v1294 = vunpack.c.l.b16 %v56
  %v1295 = vunpack.c.l.b16 %v57
  %v1296 = vunpack.c.l.b16 %v58
  %v1297 = vunpack.c.l.b16 %v59
  %v1298 = vunpack.c.l.b16 %v60
  %v1299 = vunpack.c.l.b16 %v61
  %v1300 = vunpack.c.l.b16 %v62
  %v1301 = vunpack.c.l.b16 %v63
  %v1302 = vpack.c.b16 %v1295, %v1294
  %v1303 = vpack.c.b16 %v1297, %v1296
  %v1304 = vpack.c.b16 %v1299, %v1298
  %v1305 = vpack.c.b16 %v1301, %v1300
  %v1311 = vsel %vm334, %v1285, 0
  %1313 = vmatpush.bf16.msra.mxu0 0
  %1314 = vmatpush.bf16.msra.mxu0 0
  %1315 = vmatpush.bf16.msra.mxu0 0
  %1316 = vmatpush.bf16.msra.mxu0 0
  %1317 = vmatpush.bf16.msra.mxu0 %v1305
  %1318 = vmatpush.bf16.msra.mxu0 %v1304
  %1319 = vmatpush.bf16.msra.mxu0 %v1303
  %1320 = vmatpush.bf16.msra.mxu0 %v1302
  %1321 = vmatmul.bf16.gmra.mxu0 %v1311
  %v1322 = vpop.f32.mrf.mxu0
  %v1323 = vadd.f32 %v20, %v1322
  %v1324 = vpop.f32.mrf.mxu0
  %1325 = vdwg.mxu0
  %vm1326 = vcmask 23552
  %1327 = vst.msk [vmem:[%s3] sm:$0xff] %vm1326, %v1323
  // Predicated region
  $region14: #{cnnlstm_forward.1} parent=0 // pred_check
    _
  $region15: #{cnnlstm_forward.1} parent=0 // pred_check_branch
    %1329 = sbr.rel (0) target = $region17
  $region16: #{cnnlstm_forward.1} parent=0 // pred_region
    _
  $region17: #{cnnlstm_forward.1} parent=0 // pred_fallthru
    _
  // Predicated region
  $region18: #{cnnlstm_forward.1} parent=0 // pred_check
    _
  $region19: #{cnnlstm_forward.1} parent=0 // pred_check_branch
    %1331 = sbr.rel (0) target = $region21
  $region20: #{cnnlstm_forward.1} parent=0 // pred_region
    _
  $region21: #{cnnlstm_forward.1} parent=0 // pred_fallthru
    _

</llo_original>
